<compile_context>
chip_gen: v7x
topology: tpu7x:2x2x1
jax: 0.10.0
libtpu: 0.0.40
codegen_flags: <defaults>
</compile_context>

<pallas_src>
import functools

import jax
import jax.numpy as jnp
from jax.experimental import pallas as pl
from jax.experimental.pallas import tpu as pltpu


# ----------------------------------------------------------------------------
# Pallas kernel: fused 3x3 conv (single stacked-K matmul) + folded BN + ReLU
# ----------------------------------------------------------------------------
def _conv3x3_bn_act_kernel(mask_ref, xl_ref, xa_ref, xr_ref, w_ref, b_ref,
                           o_ref, col_ref, *, wp, relu):
    """Produce one (Cout, tm) output tile in the padded-flattened layout.

    mask_ref: (1, tm)        f32  -- 1.0 at interior lanes, 0.0 at ring/tail
    xl_ref  : (Cin, halo)    bf16 -- left halo (last `halo` lanes of tile j-1)
    xa_ref  : (Cin, tm)      bf16 -- activation tile j
    xr_ref  : (Cin, halo)    bf16 -- right halo (first `halo` lanes of tile j+1)
    w_ref   : (Cout, 9*Cin)  bf16 -- BN-scale-folded weights, K = tap*Cin + ci
    b_ref   : (Cout, 1)      f32  -- folded BatchNorm bias
    o_ref   : (Cout, tm)
    col_ref : (9*Cin, tm)    bf16 -- VMEM im2col scratch
    """
    cin, tm = xa_ref.shape
    hl = xl_ref.shape[1]

    xl = xl_ref[...]
    xa = xa_ref[...]
    xr = xr_ref[...]

    # Build the (9*Cin, tm) im2col block from 9 statically lane-shifted views.
    # Output lane m (padded position) needs input lanes m + (dy-1)*Wp + (dx-1).
    for dy in range(3):
        for dx in range(3):
            t = dy * 3 + dx
            off = (dy - 1) * wp + (dx - 1)           # static lane offset
            if off == 0:
                v = xa
            elif off < 0:
                k = -off
                v = jnp.concatenate([xl[:, hl - k:], xa[:, :tm - k]], axis=1)
            else:
                v = jnp.concatenate([xa[:, off:], xr[:, :off]], axis=1)
            col_ref[pl.ds(t * cin, cin), :] = v

    # One MXU matmul with contraction depth 9*Cin, f32 accumulation.
    y = jnp.dot(w_ref[...], col_ref[...], preferred_element_type=jnp.float32)
    y = y + b_ref[...]                               # folded BN bias
    if relu:
        y = jnp.maximum(y, 0.0)
    # Zero the padded ring / cross-image / tail lanes so this output is directly
    # consumable as the next conv's padded-flattened input.
    o_ref[...] = (y * mask_ref[...]).astype(o_ref.dtype)


def conv3x3_bn_act_cm(mask, x_cm, w_stacked, bias, *, wp, tm, nblk, halo,
                      out_dtype, relu=True):
    """x_cm: (Cin, nblk*tm) bf16 padded-flattened activations -> (Cout, nblk*tm)."""
    cin = x_cm.shape[0]
    cout = w_stacked.shape[0]
    assert tm % halo == 0, (tm, halo)
    assert halo >= wp + 1 and tm > wp + 1, (tm, halo, wp)
    hb = tm // halo                     # halo blocks per tile
    last_halo_blk = nblk * hb - 1       # clamp: last tile's right halo is unused

    kernel = functools.partial(_conv3x3_bn_act_kernel, wp=wp, relu=relu)
    return pl.pallas_call(
        kernel,
        out_shape=jax.ShapeDtypeStruct((cout, nblk * tm), out_dtype),
        grid=(nblk,),
        in_specs=[
            pl.BlockSpec((1, tm), lambda j: (0, j)),                    # ring mask
            pl.BlockSpec((cin, halo),
                         lambda j: (0, jnp.maximum(j * hb - 1, 0))),    # left halo
            pl.BlockSpec((cin, tm), lambda j: (0, j)),                  # tile j
            pl.BlockSpec((cin, halo),
                         lambda j: (0, jnp.minimum((j + 1) * hb,
                                                   last_halo_blk))),    # right halo
            pl.BlockSpec((cout, 9 * cin), lambda j: (0, 0)),            # resident weights
            pl.BlockSpec((cout, 1), lambda j: (0, 0)),                  # folded BN bias
        ],
        out_specs=pl.BlockSpec((cout, tm), lambda j: (0, j)),
        scratch_shapes=[pltpu.VMEM((9 * cin, tm), jnp.bfloat16)],
        compiler_params=pltpu.CompilerParams(
            dimension_semantics=("parallel",),
            vmem_limit_bytes=32 * 1024 * 1024,
        ),
    )(mask, x_cm, x_cm, x_cm, w_stacked, bias.reshape(cout, 1))


# ----------------------------------------------------------------------------
# Tiling choice: multiple of the halo block, nblk even and >= 4 (v7x megacore)
# ----------------------------------------------------------------------------
def _choose_tm(mp, halo, tm_max):
    tm_max = max(halo, (tm_max // halo) * halo)
    for tm in range(tm_max, halo - 1, -halo):
        nblk = pl.cdiv(mp, tm)
        if nblk >= 4 and nblk % 2 == 0:
            return tm
    return tm_max


# ----------------------------------------------------------------------------
# double_conv forward: (conv3x3 -> BN -> ReLU) * 2
# ----------------------------------------------------------------------------
def double_conv_forward(x_nchw, params, *, tm_max=512):
    n, cin, h, w = x_nchw.shape
    hp, wp = h + 2, w + 2
    mp = n * hp * wp
    halo = pl.cdiv(wp + 1, 128) * 128
    tm = _choose_tm(mp, halo, tm_max)
    nblk = pl.cdiv(mp, tm)

    # Channel-major, zero-padded-spatial, flattened activations: (Cin, nblk*tm).
    xp = jnp.pad(x_nchw, ((0, 0), (0, 0), (1, 1), (1, 1)))
    x_cm = jnp.transpose(xp, (1, 0, 2, 3)).reshape(cin, mp).astype(jnp.bfloat16)
    x_cm = jnp.pad(x_cm, ((0, 0), (0, nblk * tm - mp)))

    # Interior mask: 1.0 at real image lanes, 0.0 at padding ring / tail lanes.
    lane = jnp.arange(nblk * tm, dtype=jnp.int32)
    r = (lane // wp) % hp
    c = lane % wp
    interior = (lane < mp) & (r >= 1) & (r <= h) & (c >= 1) & (c <= w)
    mask = interior.astype(jnp.float32).reshape(1, -1)

    y1 = conv3x3_bn_act_cm(mask, x_cm, params['w1'], params['b1'],
                           wp=wp, tm=tm, nblk=nblk, halo=halo,
                           out_dtype=jnp.bfloat16)
    # y1 is already in the zero-ringed padded-flattened layout conv2 expects:
    # no crop / transpose / re-pad XLA glue between the two convs.
    y2 = conv3x3_bn_act_cm(mask, y1, params['w2'], params['b2'],
                           wp=wp, tm=tm, nblk=nblk, halo=halo,
                           out_dtype=jnp.float32)

    cout = y2.shape[0]
    y = y2[:, :mp].reshape(cout, n, hp, wp)[:, :, 1:h + 1, 1:w + 1]
    return jnp.transpose(y, (1, 0, 2, 3))            # back to NCHW


# ----------------------------------------------------------------------------
# Deterministic parameter init (inference-mode BN folded into weights/bias)
# ----------------------------------------------------------------------------
def _fold_bn(conv_bias, gamma, beta, mean, var, eps=1e-5):
    s = gamma / jnp.sqrt(var + eps)
    b = (conv_bias - mean) * s + beta
    return s, b


def _init_conv_bn(key, cin, cout):
    ks = jax.random.split(key, 4)
    w = 0.05 * jax.random.normal(ks[0], (cout, cin, 3, 3), jnp.float32)   # OIHW
    cb = 0.05 * jax.random.normal(ks[1], (cout,), jnp.float32)
    gamma = 1.0 + 0.1 * jax.random.normal(ks[2], (cout,), jnp.float32)
    beta = 0.1 * jax.random.normal(ks[3], (cout,), jnp.float32)
    s, b = _fold_bn(cb, gamma, beta, jnp.zeros((cout,)), jnp.ones((cout,)))
    return w, s, b


def _stack_weights(w_oihw, scale):
    """(Cout, Cin, 3, 3) -> (Cout, 9*Cin) bf16 with BN scale folded in.
    K index = (dy*3 + dx)*Cin + ci, matching the kernel's im2col row layout."""
    cout, cin = w_oihw.shape[:2]
    w = w_oihw * scale[:, None, None, None]
    return jnp.transpose(w, (0, 2, 3, 1)).reshape(cout, 9 * cin).astype(jnp.bfloat16)


def init_double_conv(key, in_ch, out_ch):
    k1, k2 = jax.random.split(key)
    w1, s1, b1 = _init_conv_bn(k1, in_ch, out_ch)
    w2, s2, b2 = _init_conv_bn(k2, out_ch, out_ch)
    kernel_params = dict(w1=_stack_weights(w1, s1), b1=b1,
                         w2=_stack_weights(w2, s2), b2=b2)
    torch_params = dict(w1=w1, s1=s1, b1=b1, w2=w2, s2=s2, b2=b2)
    return kernel_params, torch_params


# ----------------------------------------------------------------------------
# Pure-JAX reference (mimics the kernel's bf16 operands / bf16 intermediate)
# ----------------------------------------------------------------------------
def _ref_conv_bn_relu(x, w_oihw, s, b):
    w_eff = (w_oihw * s[:, None, None, None]).astype(jnp.bfloat16).astype(jnp.float32)
    xb = x.astype(jnp.bfloat16).astype(jnp.float32)
    y = jax.lax.conv_general_dilated(
        xb, w_eff, window_strides=(1, 1), padding=((1, 1), (1, 1)),
        dimension_numbers=('NCHW', 'OIHW', 'NCHW'))
    y = y + b[None, :, None, None]
    return jnp.maximum(y, 0.0)


def reference_double_conv(x, tp):
    y = _ref_conv_bn_relu(x, tp['w1'], tp['s1'], tp['b1'])
    y = y.astype(jnp.bfloat16).astype(jnp.float32)    # kernel intermediate is bf16
    return _ref_conv_bn_relu(y, tp['w2'], tp['s2'], tp['b2'])


if __name__ == "__main__":
    key = jax.random.PRNGKey(0)
    n, in_ch, out_ch, h, w = 2, 16, 32, 32, 32
    kx, kp = jax.random.split(key)

    x = jax.random.normal(kx, (n, in_ch, h, w), jnp.float32)
    params, torch_params = init_double_conv(kp, in_ch, out_ch)

    fwd = jax.jit(functools.partial(double_conv_forward, params=params))
    out = jax.block_until_ready(fwd(x))
    assert out.shape == (n, out_ch, h, w), out.shape
    assert out.dtype == jnp.float32

    ref = reference_double_conv(x, torch_params)
    err = float(jnp.max(jnp.abs(out - ref)))
    assert err < 5e-2, f"max abs err vs reference: {err}"
    print("KERNEL_OK")
</pallas_src>

<mosaic_0001>
module attributes {stable_mosaic.version = 11 : i64} {
  func.func @_conv3x3_bn_act_kernel(%arg0: i32, %arg1: memref<1x256xf32, #tpu.memory_space<vmem>>, %arg2: memref<16x128xbf16, #tpu.memory_space<vmem>>, %arg3: memref<16x256xbf16, #tpu.memory_space<vmem>>, %arg4: memref<16x128xbf16, #tpu.memory_space<vmem>>, %arg5: memref<32x144xbf16, #tpu.memory_space<vmem>>, %arg6: memref<32x1xf32, #tpu.memory_space<vmem>>, %arg7: memref<32x256xbf16, #tpu.memory_space<vmem>>, %arg8: memref<144x256xbf16, #tpu.memory_space<vmem>>) attributes {dimension_semantics = [#tpu.dimension_semantics<parallel>], iteration_bounds = array<i64: 10>, scalar_prefetch = 0 : i64, scratch_operands = 1 : i64, tpu.core_type = #tpu.core_type<tc>, window_params = [{transform_indices = @transform_0, window_bounds = array<i64: 1, 256>}, {transform_indices = @transform_1, window_bounds = array<i64: 16, 128>}, {transform_indices = @transform_2, window_bounds = array<i64: 16, 256>}, {transform_indices = @transform_3, window_bounds = array<i64: 16, 128>}, {pipeline_mode = #tpu.pipeline_mode<synchronous>, transform_indices = @transform_4, window_bounds = array<i64: 32, 144>}, {pipeline_mode = #tpu.pipeline_mode<synchronous>, transform_indices = @transform_5, window_bounds = array<i64: 32, 1>}, {transform_indices = @transform_6, window_bounds = array<i64: 32, 256>}]} {
    %c0 = arith.constant 0 : index
    %c0_0 = arith.constant 0 : index
    %0 = vector.load %arg2[%c0, %c0_0] : memref<16x128xbf16, #tpu.memory_space<vmem>>, vector<16x128xbf16>
    %c0_1 = arith.constant 0 : index
    %c0_2 = arith.constant 0 : index
    %1 = vector.load %arg3[%c0_1, %c0_2] : memref<16x256xbf16, #tpu.memory_space<vmem>>, vector<16x256xbf16>
    %c0_3 = arith.constant 0 : index
    %c0_4 = arith.constant 0 : index
    %2 = vector.load %arg4[%c0_3, %c0_4] : memref<16x128xbf16, #tpu.memory_space<vmem>>, vector<16x128xbf16>
    %3 = vector.extract_strided_slice %0 {offsets = [0, 93], sizes = [16, 35], strides = [1, 1]} : vector<16x128xbf16> to vector<16x35xbf16>
    %4 = vector.extract_strided_slice %1 {offsets = [0, 0], sizes = [16, 221], strides = [1, 1]} : vector<16x256xbf16> to vector<16x221xbf16>
    %5 = tpu.concatenate %3, %4 in 1 : vector<16x35xbf16>, vector<16x221xbf16> -> vector<16x256xbf16>
    %c0_5 = arith.constant 0 : index
    %c0_6 = arith.constant 0 : index
    %6 = vector.load %arg8[%c0_5, %c0_6] : memref<144x256xbf16, #tpu.memory_space<vmem>>, vector<16x256xbf16>
    tpu.vector_store %arg8[%c0_5, %c0_6], %5 {strides = array<i32>} : memref<144x256xbf16, #tpu.memory_space<vmem>>, vector<16x256xbf16>,
    %7 = vector.extract_strided_slice %0 {offsets = [0, 94], sizes = [16, 34], strides = [1, 1]} : vector<16x128xbf16> to vector<16x34xbf16>
    %8 = vector.extract_strided_slice %1 {offsets = [0, 0], sizes = [16, 222], strides = [1, 1]} : vector<16x256xbf16> to vector<16x222xbf16>
    %9 = tpu.concatenate %7, %8 in 1 : vector<16x34xbf16>, vector<16x222xbf16> -> vector<16x256xbf16>
    %c16 = arith.constant 16 : index
    %c0_7 = arith.constant 0 : index
    %10 = vector.load %arg8[%c16, %c0_7] : memref<144x256xbf16, #tpu.memory_space<vmem>>, vector<16x256xbf16>
    tpu.vector_store %arg8[%c16, %c0_7], %9 {strides = array<i32>} : memref<144x256xbf16, #tpu.memory_space<vmem>>, vector<16x256xbf16>,
    %11 = vector.extract_strided_slice %0 {offsets = [0, 95], sizes = [16, 33], strides = [1, 1]} : vector<16x128xbf16> to vector<16x33xbf16>
    %12 = vector.extract_strided_slice %1 {offsets = [0, 0], sizes = [16, 223], strides = [1, 1]} : vector<16x256xbf16> to vector<16x223xbf16>
    %13 = tpu.concatenate %11, %12 in 1 : vector<16x33xbf16>, vector<16x223xbf16> -> vector<16x256xbf16>
    %c32 = arith.constant 32 : index
    %c0_8 = arith.constant 0 : index
    %14 = vector.load %arg8[%c32, %c0_8] : memref<144x256xbf16, #tpu.memory_space<vmem>>, vector<16x256xbf16>
    tpu.vector_store %arg8[%c32, %c0_8], %13 {strides = array<i32>} : memref<144x256xbf16, #tpu.memory_space<vmem>>, vector<16x256xbf16>,
    %15 = vector.extract_strided_slice %0 {offsets = [0, 127], sizes = [16, 1], strides = [1, 1]} : vector<16x128xbf16> to vector<16x1xbf16>
    %16 = vector.extract_strided_slice %1 {offsets = [0, 0], sizes = [16, 255], strides = [1, 1]} : vector<16x256xbf16> to vector<16x255xbf16>
    %17 = tpu.concatenate %15, %16 in 1 : vector<16x1xbf16>, vector<16x255xbf16> -> vector<16x256xbf16>
    %c48 = arith.constant 48 : index
    %c0_9 = arith.constant 0 : index
    %18 = vector.load %arg8[%c48, %c0_9] : memref<144x256xbf16, #tpu.memory_space<vmem>>, vector<16x256xbf16>
    tpu.vector_store %arg8[%c48, %c0_9], %17 {strides = array<i32>} : memref<144x256xbf16, #tpu.memory_space<vmem>>, vector<16x256xbf16>,
    %c64 = arith.constant 64 : index
    %c0_10 = arith.constant 0 : index
    %19 = vector.load %arg8[%c64, %c0_10] : memref<144x256xbf16, #tpu.memory_space<vmem>>, vector<16x256xbf16>
    tpu.vector_store %arg8[%c64, %c0_10], %1 {strides = array<i32>} : memref<144x256xbf16, #tpu.memory_space<vmem>>, vector<16x256xbf16>,
    %20 = vector.extract_strided_slice %1 {offsets = [0, 1], sizes = [16, 255], strides = [1, 1]} : vector<16x256xbf16> to vector<16x255xbf16>
    %21 = vector.extract_strided_slice %2 {offsets = [0, 0], sizes = [16, 1], strides = [1, 1]} : vector<16x128xbf16> to vector<16x1xbf16>
    %22 = tpu.concatenate %20, %21 in 1 : vector<16x255xbf16>, vector<16x1xbf16> -> vector<16x256xbf16>
    %c80 = arith.constant 80 : index
    %c0_11 = arith.constant 0 : index
    %23 = vector.load %arg8[%c80, %c0_11] : memref<144x256xbf16, #tpu.memory_space<vmem>>, vector<16x256xbf16>
    tpu.vector_store %arg8[%c80, %c0_11], %22 {strides = array<i32>} : memref<144x256xbf16, #tpu.memory_space<vmem>>, vector<16x256xbf16>,
    %24 = vector.extract_strided_slice %1 {offsets = [0, 33], sizes = [16, 223], strides = [1, 1]} : vector<16x256xbf16> to vector<16x223xbf16>
    %25 = vector.extract_strided_slice %2 {offsets = [0, 0], sizes = [16, 33], strides = [1, 1]} : vector<16x128xbf16> to vector<16x33xbf16>
    %26 = tpu.concatenate %24, %25 in 1 : vector<16x223xbf16>, vector<16x33xbf16> -> vector<16x256xbf16>
    %c96 = arith.constant 96 : index
    %c0_12 = arith.constant 0 : index
    %27 = vector.load %arg8[%c96, %c0_12] : memref<144x256xbf16, #tpu.memory_space<vmem>>, vector<16x256xbf16>
    tpu.vector_store %arg8[%c96, %c0_12], %26 {strides = array<i32>} : memref<144x256xbf16, #tpu.memory_space<vmem>>, vector<16x256xbf16>,
    %28 = vector.extract_strided_slice %1 {offsets = [0, 34], sizes = [16, 222], strides = [1, 1]} : vector<16x256xbf16> to vector<16x222xbf16>
    %29 = vector.extract_strided_slice %2 {offsets = [0, 0], sizes = [16, 34], strides = [1, 1]} : vector<16x128xbf16> to vector<16x34xbf16>
    %30 = tpu.concatenate %28, %29 in 1 : vector<16x222xbf16>, vector<16x34xbf16> -> vector<16x256xbf16>
    %c112 = arith.constant 112 : index
    %c0_13 = arith.constant 0 : index
    %31 = vector.load %arg8[%c112, %c0_13] : memref<144x256xbf16, #tpu.memory_space<vmem>>, vector<16x256xbf16>
    tpu.vector_store %arg8[%c112, %c0_13], %30 {strides = array<i32>} : memref<144x256xbf16, #tpu.memory_space<vmem>>, vector<16x256xbf16>,
    %32 = vector.extract_strided_slice %1 {offsets = [0, 35], sizes = [16, 221], strides = [1, 1]} : vector<16x256xbf16> to vector<16x221xbf16>
    %33 = vector.extract_strided_slice %2 {offsets = [0, 0], sizes = [16, 35], strides = [1, 1]} : vector<16x128xbf16> to vector<16x35xbf16>
    %34 = tpu.concatenate %32, %33 in 1 : vector<16x221xbf16>, vector<16x35xbf16> -> vector<16x256xbf16>
    %c128 = arith.constant 128 : index
    %c0_14 = arith.constant 0 : index
    %35 = vector.load %arg8[%c128, %c0_14] : memref<144x256xbf16, #tpu.memory_space<vmem>>, vector<16x256xbf16>
    tpu.vector_store %arg8[%c128, %c0_14], %34 {strides = array<i32>} : memref<144x256xbf16, #tpu.memory_space<vmem>>, vector<16x256xbf16>,
    %c0_15 = arith.constant 0 : index
    %c0_16 = arith.constant 0 : index
    %36 = vector.load %arg5[%c0_15, %c0_16] : memref<32x144xbf16, #tpu.memory_space<vmem>>, vector<32x144xbf16>
    %c0_17 = arith.constant 0 : index
    %c0_18 = arith.constant 0 : index
    %37 = vector.load %arg8[%c0_17, %c0_18] : memref<144x256xbf16, #tpu.memory_space<vmem>>, vector<144x256xbf16>
    %cst = arith.constant dense<0.000000e+00> : vector<32x256xf32>
    %38 = tpu.matmul %36, %37, %cst {dimension_numbers = #tpu.dot_dimension_numbers<[1], [0], [0], [1], [0, 0, 1, 1], [], []>} : vector<32x144xbf16>, vector<144x256xbf16>, vector<32x256xf32> -> vector<32x256xf32>
    %c0_19 = arith.constant 0 : index
    %c0_20 = arith.constant 0 : index
    %39 = vector.load %arg6[%c0_19, %c0_20] : memref<32x1xf32, #tpu.memory_space<vmem>>, vector<32x1xf32>
    %40 = vector.broadcast %39 : vector<32x1xf32> to vector<32x256xf32>
    %41 = arith.addf %38, %40 : vector<32x256xf32>
    %cst_21 = arith.constant 0.000000e+00 : f32
    %42 = vector.broadcast %cst_21 : f32 to vector<32x256xf32>
    %43 = arith.maximumf %41, %42 : vector<32x256xf32>
    %c0_22 = arith.constant 0 : index
    %c0_23 = arith.constant 0 : index
    %44 = vector.load %arg1[%c0_22, %c0_23] : memref<1x256xf32, #tpu.memory_space<vmem>>, vector<1x256xf32>
    %45 = vector.broadcast %44 : vector<1x256xf32> to vector<32x256xf32>
    %46 = arith.mulf %43, %45 : vector<32x256xf32>
    %47 = arith.truncf %46 : vector<32x256xf32> to vector<32x256xbf16>
    %c0_24 = arith.constant 0 : index
    %c0_25 = arith.constant 0 : index
    %48 = vector.load %arg7[%c0_24, %c0_25] : memref<32x256xbf16, #tpu.memory_space<vmem>>, vector<32x256xbf16>
    tpu.vector_store %arg7[%c0_24, %c0_25], %47 {strides = array<i32>} : memref<32x256xbf16, #tpu.memory_space<vmem>>, vector<32x256xbf16>,
    return
  }
  func.func @transform_0(%arg0: i32) -> (i32, i32) {
    %c0_i32 = arith.constant 0 : i32
    %c0_i32_0 = arith.constant 0 : i32
    return %c0_i32, %arg0 : i32, i32
  }
  func.func @transform_1(%arg0: i32) -> (i32, i32) {
    %c2_i32 = arith.constant 2 : i32
    %0 = arith.muli %arg0, %c2_i32 : i32
    %c1_i32 = arith.constant 1 : i32
    %1 = arith.subi %0, %c1_i32 : i32
    %c0_i32 = arith.constant 0 : i32
    %2 = arith.maxsi %1, %c0_i32 : i32
    %c0_i32_0 = arith.constant 0 : i32
    %c0_i32_1 = arith.constant 0 : i32
    return %c0_i32_0, %2 : i32, i32
  }
  func.func @transform_2(%arg0: i32) -> (i32, i32) {
    %c0_i32 = arith.constant 0 : i32
    %c0_i32_0 = arith.constant 0 : i32
    return %c0_i32, %arg0 : i32, i32
  }
  func.func @transform_3(%arg0: i32) -> (i32, i32) {
    %c1_i32 = arith.constant 1 : i32
    %0 = arith.addi %arg0, %c1_i32 : i32
    %c2_i32 = arith.constant 2 : i32
    %1 = arith.muli %0, %c2_i32 : i32
    %c19_i32 = arith.constant 19 : i32
    %2 = arith.minsi %1, %c19_i32 : i32
    %c0_i32 = arith.constant 0 : i32
    %c0_i32_0 = arith.constant 0 : i32
    return %c0_i32, %2 : i32, i32
  }
  func.func @transform_4(%arg0: i32) -> (i32, i32) {
    %c0_i32 = arith.constant 0 : i32
    %c0_i32_0 = arith.constant 0 : i32
    %c0_i32_1 = arith.constant 0 : i32
    return %c0_i32, %c0_i32_0 : i32, i32
  }
  func.func @transform_5(%arg0: i32) -> (i32, i32) {
    %c0_i32 = arith.constant 0 : i32
    %c0_i32_0 = arith.constant 0 : i32
    %c0_i32_1 = arith.constant 0 : i32
    return %c0_i32, %c0_i32_0 : i32, i32
  }
  func.func @transform_6(%arg0: i32) -> (i32, i32) {
    %c0_i32 = arith.constant 0 : i32
    %c0_i32_0 = arith.constant 0 : i32
    return %c0_i32, %arg0 : i32, i32
  }
}

module attributes {stable_mosaic.version = 11 : i64} {
  func.func @_conv3x3_bn_act_kernel(%arg0: i32, %arg1: memref<1x256xf32, #tpu.memory_space<vmem>>, %arg2: memref<32x128xbf16, #tpu.memory_space<vmem>>, %arg3: memref<32x256xbf16, #tpu.memory_space<vmem>>, %arg4: memref<32x128xbf16, #tpu.memory_space<vmem>>, %arg5: memref<32x288xbf16, #tpu.memory_space<vmem>>, %arg6: memref<32x1xf32, #tpu.memory_space<vmem>>, %arg7: memref<32x256xf32, #tpu.memory_space<vmem>>, %arg8: memref<288x256xbf16, #tpu.memory_space<vmem>>) attributes {dimension_semantics = [#tpu.dimension_semantics<parallel>], iteration_bounds = array<i64: 10>, scalar_prefetch = 0 : i64, scratch_operands = 1 : i64, tpu.core_type = #tpu.core_type<tc>, window_params = [{transform_indices = @transform_0, window_bounds = array<i64: 1, 256>}, {transform_indices = @transform_1, window_bounds = array<i64: 32, 128>}, {transform_indices = @transform_2, window_bounds = array<i64: 32, 256>}, {transform_indices = @transform_3, window_bounds = array<i64: 32, 128>}, {pipeline_mode = #tpu.pipeline_mode<synchronous>, transform_indices = @transform_4, window_bounds = array<i64: 32, 288>}, {pipeline_mode = #tpu.pipeline_mode<synchronous>, transform_indices = @transform_5, window_bounds = array<i64: 32, 1>}, {transform_indices = @transform_6, window_bounds = array<i64: 32, 256>}]} {
    %c0 = arith.constant 0 : index
    %c0_0 = arith.constant 0 : index
    %0 = vector.load %arg2[%c0, %c0_0] : memref<32x128xbf16, #tpu.memory_space<vmem>>, vector<32x128xbf16>
    %c0_1 = arith.constant 0 : index
    %c0_2 = arith.constant 0 : index
    %1 = vector.load %arg3[%c0_1, %c0_2] : memref<32x256xbf16, #tpu.memory_space<vmem>>, vector<32x256xbf16>
    %c0_3 = arith.constant 0 : index
    %c0_4 = arith.constant 0 : index
    %2 = vector.load %arg4[%c0_3, %c0_4] : memref<32x128xbf16, #tpu.memory_space<vmem>>, vector<32x128xbf16>
    %3 = vector.extract_strided_slice %0 {offsets = [0, 93], sizes = [32, 35], strides = [1, 1]} : vector<32x128xbf16> to vector<32x35xbf16>
    %4 = vector.extract_strided_slice %1 {offsets = [0, 0], sizes = [32, 221], strides = [1, 1]} : vector<32x256xbf16> to vector<32x221xbf16>
    %5 = tpu.concatenate %3, %4 in 1 : vector<32x35xbf16>, vector<32x221xbf16> -> vector<32x256xbf16>
    %c0_5 = arith.constant 0 : index
    %c0_6 = arith.constant 0 : index
    %6 = vector.load %arg8[%c0_5, %c0_6] : memref<288x256xbf16, #tpu.memory_space<vmem>>, vector<32x256xbf16>
    tpu.vector_store %arg8[%c0_5, %c0_6], %5 {strides = array<i32>} : memref<288x256xbf16, #tpu.memory_space<vmem>>, vector<32x256xbf16>,
    %7 = vector.extract_strided_slice %0 {offsets = [0, 94], sizes = [32, 34], strides = [1, 1]} : vector<32x128xbf16> to vector<32x34xbf16>
    %8 = vector.extract_strided_slice %1 {offsets = [0, 0], sizes = [32, 222], strides = [1, 1]} : vector<32x256xbf16> to vector<32x222xbf16>
    %9 = tpu.concatenate %7, %8 in 1 : vector<32x34xbf16>, vector<32x222xbf16> -> vector<32x256xbf16>
    %c32 = arith.constant 32 : index
    %c0_7 = arith.constant 0 : index
    %10 = vector.load %arg8[%c32, %c0_7] : memref<288x256xbf16, #tpu.memory_space<vmem>>, vector<32x256xbf16>
    tpu.vector_store %arg8[%c32, %c0_7], %9 {strides = array<i32>} : memref<288x256xbf16, #tpu.memory_space<vmem>>, vector<32x256xbf16>,
    %11 = vector.extract_strided_slice %0 {offsets = [0, 95], sizes = [32, 33], strides = [1, 1]} : vector<32x128xbf16> to vector<32x33xbf16>
    %12 = vector.extract_strided_slice %1 {offsets = [0, 0], sizes = [32, 223], strides = [1, 1]} : vector<32x256xbf16> to vector<32x223xbf16>
    %13 = tpu.concatenate %11, %12 in 1 : vector<32x33xbf16>, vector<32x223xbf16> -> vector<32x256xbf16>
    %c64 = arith.constant 64 : index
    %c0_8 = arith.constant 0 : index
    %14 = vector.load %arg8[%c64, %c0_8] : memref<288x256xbf16, #tpu.memory_space<vmem>>, vector<32x256xbf16>
    tpu.vector_store %arg8[%c64, %c0_8], %13 {strides = array<i32>} : memref<288x256xbf16, #tpu.memory_space<vmem>>, vector<32x256xbf16>,
    %15 = vector.extract_strided_slice %0 {offsets = [0, 127], sizes = [32, 1], strides = [1, 1]} : vector<32x128xbf16> to vector<32x1xbf16>
    %16 = vector.extract_strided_slice %1 {offsets = [0, 0], sizes = [32, 255], strides = [1, 1]} : vector<32x256xbf16> to vector<32x255xbf16>
    %17 = tpu.concatenate %15, %16 in 1 : vector<32x1xbf16>, vector<32x255xbf16> -> vector<32x256xbf16>
    %c96 = arith.constant 96 : index
    %c0_9 = arith.constant 0 : index
    %18 = vector.load %arg8[%c96, %c0_9] : memref<288x256xbf16, #tpu.memory_space<vmem>>, vector<32x256xbf16>
    tpu.vector_store %arg8[%c96, %c0_9], %17 {strides = array<i32>} : memref<288x256xbf16, #tpu.memory_space<vmem>>, vector<32x256xbf16>,
    %c128 = arith.constant 128 : index
    %c0_10 = arith.constant 0 : index
    %19 = vector.load %arg8[%c128, %c0_10] : memref<288x256xbf16, #tpu.memory_space<vmem>>, vector<32x256xbf16>
    tpu.vector_store %arg8[%c128, %c0_10], %1 {strides = array<i32>} : memref<288x256xbf16, #tpu.memory_space<vmem>>, vector<32x256xbf16>,
    %20 = vector.extract_strided_slice %1 {offsets = [0, 1], sizes = [32, 255], strides = [1, 1]} : vector<32x256xbf16> to vector<32x255xbf16>
    %21 = vector.extract_strided_slice %2 {offsets = [0, 0], sizes = [32, 1], strides = [1, 1]} : vector<32x128xbf16> to vector<32x1xbf16>
    %22 = tpu.concatenate %20, %21 in 1 : vector<32x255xbf16>, vector<32x1xbf16> -> vector<32x256xbf16>
    %c160 = arith.constant 160 : index
    %c0_11 = arith.constant 0 : index
    %23 = vector.load %arg8[%c160, %c0_11] : memref<288x256xbf16, #tpu.memory_space<vmem>>, vector<32x256xbf16>
    tpu.vector_store %arg8[%c160, %c0_11], %22 {strides = array<i32>} : memref<288x256xbf16, #tpu.memory_space<vmem>>, vector<32x256xbf16>,
    %24 = vector.extract_strided_slice %1 {offsets = [0, 33], sizes = [32, 223], strides = [1, 1]} : vector<32x256xbf16> to vector<32x223xbf16>
    %25 = vector.extract_strided_slice %2 {offsets = [0, 0], sizes = [32, 33], strides = [1, 1]} : vector<32x128xbf16> to vector<32x33xbf16>
    %26 = tpu.concatenate %24, %25 in 1 : vector<32x223xbf16>, vector<32x33xbf16> -> vector<32x256xbf16>
    %c192 = arith.constant 192 : index
    %c0_12 = arith.constant 0 : index
    %27 = vector.load %arg8[%c192, %c0_12] : memref<288x256xbf16, #tpu.memory_space<vmem>>, vector<32x256xbf16>
    tpu.vector_store %arg8[%c192, %c0_12], %26 {strides = array<i32>} : memref<288x256xbf16, #tpu.memory_space<vmem>>, vector<32x256xbf16>,
    %28 = vector.extract_strided_slice %1 {offsets = [0, 34], sizes = [32, 222], strides = [1, 1]} : vector<32x256xbf16> to vector<32x222xbf16>
    %29 = vector.extract_strided_slice %2 {offsets = [0, 0], sizes = [32, 34], strides = [1, 1]} : vector<32x128xbf16> to vector<32x34xbf16>
    %30 = tpu.concatenate %28, %29 in 1 : vector<32x222xbf16>, vector<32x34xbf16> -> vector<32x256xbf16>
    %c224 = arith.constant 224 : index
    %c0_13 = arith.constant 0 : index
    %31 = vector.load %arg8[%c224, %c0_13] : memref<288x256xbf16, #tpu.memory_space<vmem>>, vector<32x256xbf16>
    tpu.vector_store %arg8[%c224, %c0_13], %30 {strides = array<i32>} : memref<288x256xbf16, #tpu.memory_space<vmem>>, vector<32x256xbf16>,
    %32 = vector.extract_strided_slice %1 {offsets = [0, 35], sizes = [32, 221], strides = [1, 1]} : vector<32x256xbf16> to vector<32x221xbf16>
    %33 = vector.extract_strided_slice %2 {offsets = [0, 0], sizes = [32, 35], strides = [1, 1]} : vector<32x128xbf16> to vector<32x35xbf16>
    %34 = tpu.concatenate %32, %33 in 1 : vector<32x221xbf16>, vector<32x35xbf16> -> vector<32x256xbf16>
    %c256 = arith.constant 256 : index
    %c0_14 = arith.constant 0 : index
    %35 = vector.load %arg8[%c256, %c0_14] : memref<288x256xbf16, #tpu.memory_space<vmem>>, vector<32x256xbf16>
    tpu.vector_store %arg8[%c256, %c0_14], %34 {strides = array<i32>} : memref<288x256xbf16, #tpu.memory_space<vmem>>, vector<32x256xbf16>,
    %c0_15 = arith.constant 0 : index
    %c0_16 = arith.constant 0 : index
    %36 = vector.load %arg5[%c0_15, %c0_16] : memref<32x288xbf16, #tpu.memory_space<vmem>>, vector<32x288xbf16>
    %c0_17 = arith.constant 0 : index
    %c0_18 = arith.constant 0 : index
    %37 = vector.load %arg8[%c0_17, %c0_18] : memref<288x256xbf16, #tpu.memory_space<vmem>>, vector<288x256xbf16>
    %cst = arith.constant dense<0.000000e+00> : vector<32x256xf32>
    %38 = tpu.matmul %36, %37, %cst {dimension_numbers = #tpu.dot_dimension_numbers<[1], [0], [0], [1], [0, 0, 1, 1], [], []>} : vector<32x288xbf16>, vector<288x256xbf16>, vector<32x256xf32> -> vector<32x256xf32>
    %c0_19 = arith.constant 0 : index
    %c0_20 = arith.constant 0 : index
    %39 = vector.load %arg6[%c0_19, %c0_20] : memref<32x1xf32, #tpu.memory_space<vmem>>, vector<32x1xf32>
    %40 = vector.broadcast %39 : vector<32x1xf32> to vector<32x256xf32>
    %41 = arith.addf %38, %40 : vector<32x256xf32>
    %cst_21 = arith.constant 0.000000e+00 : f32
    %42 = vector.broadcast %cst_21 : f32 to vector<32x256xf32>
    %43 = arith.maximumf %41, %42 : vector<32x256xf32>
    %c0_22 = arith.constant 0 : index
    %c0_23 = arith.constant 0 : index
    %44 = vector.load %arg1[%c0_22, %c0_23] : memref<1x256xf32, #tpu.memory_space<vmem>>, vector<1x256xf32>
    %45 = vector.broadcast %44 : vector<1x256xf32> to vector<32x256xf32>
    %46 = arith.mulf %43, %45 : vector<32x256xf32>
    %c0_24 = arith.constant 0 : index
    %c0_25 = arith.constant 0 : index
    %47 = vector.load %arg7[%c0_24, %c0_25] : memref<32x256xf32, #tpu.memory_space<vmem>>, vector<32x256xf32>
    tpu.vector_store %arg7[%c0_24, %c0_25], %46 {strides = array<i32>} : memref<32x256xf32, #tpu.memory_space<vmem>>, vector<32x256xf32>,
    return
  }
  func.func @transform_0(%arg0: i32) -> (i32, i32) {
    %c0_i32 = arith.constant 0 : i32
    %c0_i32_0 = arith.constant 0 : i32
    return %c0_i32, %arg0 : i32, i32
  }
  func.func @transform_1(%arg0: i32) -> (i32, i32) {
    %c2_i32 = arith.constant 2 : i32
    %0 = arith.muli %arg0, %c2_i32 : i32
    %c1_i32 = arith.constant 1 : i32
    %1 = arith.subi %0, %c1_i32 : i32
    %c0_i32 = arith.constant 0 : i32
    %2 = arith.maxsi %1, %c0_i32 : i32
    %c0_i32_0 = arith.constant 0 : i32
    %c0_i32_1 = arith.constant 0 : i32
    return %c0_i32_0, %2 : i32, i32
  }
  func.func @transform_2(%arg0: i32) -> (i32, i32) {
    %c0_i32 = arith.constant 0 : i32
    %c0_i32_0 = arith.constant 0 : i32
    return %c0_i32, %arg0 : i32, i32
  }
  func.func @transform_3(%arg0: i32) -> (i32, i32) {
    %c1_i32 = arith.constant 1 : i32
    %0 = arith.addi %arg0, %c1_i32 : i32
    %c2_i32 = arith.constant 2 : i32
    %1 = arith.muli %0, %c2_i32 : i32
    %c19_i32 = arith.constant 19 : i32
    %2 = arith.minsi %1, %c19_i32 : i32
    %c0_i32 = arith.constant 0 : i32
    %c0_i32_0 = arith.constant 0 : i32
    return %c0_i32, %2 : i32, i32
  }
  func.func @transform_4(%arg0: i32) -> (i32, i32) {
    %c0_i32 = arith.constant 0 : i32
    %c0_i32_0 = arith.constant 0 : i32
    %c0_i32_1 = arith.constant 0 : i32
    return %c0_i32, %c0_i32_0 : i32, i32
  }
  func.func @transform_5(%arg0: i32) -> (i32, i32) {
    %c0_i32 = arith.constant 0 : i32
    %c0_i32_0 = arith.constant 0 : i32
    %c0_i32_1 = arith.constant 0 : i32
    return %c0_i32, %c0_i32_0 : i32, i32
  }
  func.func @transform_6(%arg0: i32) -> (i32, i32) {
    %c0_i32 = arith.constant 0 : i32
    %c0_i32_0 = arith.constant 0 : i32
    return %c0_i32, %arg0 : i32, i32
  }
}

</mosaic_0001>

<llo_original>
// kernel: double_conv_forward.2
$region0: #{double_conv_forward.2}
  #allocation0 [shape = 'u32[]', space=smem, size = 0x4, offset = 0x4, fixed_abs, tag = 'smem constant byte address 0x4 - core index']
  #allocation1 [shape = 'u32[144,128]{1,0:T(1,128)}', space=vmem, size = 0x12000, scoped, tag = 'internal scratch']
  #allocation2 [shape = 'bf16[144,256]{1,0:T(16,128)(2,1)}', space=vmem, size = 0x12000, scoped, tag = 'scratch operand']
  %s0 = inlined_call_operand.vmem [shape: f32[1,2560], index: 0, kind: input, shape index: {}]
  %s1 = inlined_call_operand.vmem [shape: bf16[16,2560], index: 1, kind: input, shape index: {}, may-alias: {1,2,3}]
  %s2 = inlined_call_operand.vmem [shape: bf16[16,2560], index: 2, kind: input, shape index: {}, may-alias: {1,2,3}]
  %s3 = inlined_call_operand.vmem [shape: bf16[16,2560], index: 3, kind: input, shape index: {}, may-alias: {1,2,3}]
  %s4 = inlined_call_operand.vmem [shape: bf16[32,144], index: 4, kind: input, shape index: {}]
  %s5 = inlined_call_operand.vmem [shape: f32[32,1], index: 5, kind: input, shape index: {}]
  %s6 = inlined_call_operand.vmem [shape: bf16[32,2560], index: 6, kind: output, shape index: {}]
  %s7 = sld [smem:[#allocation0]]
  $region211: #{double_conv_forward.2} parent=0
    _
  %s9 = ssub.s32 1, %s7
  %s10 = scalar_select 0, %s9, %s7
  $region1: #{double_conv_forward.2} parent=0
    #allocation3 [shape = 'u8[8192]{0}', space=vmem, size = 0x2000, scoped, tag = 'input window, operand 1']
    #allocation4 [shape = 'u8[16384]{0}', space=vmem, size = 0x4000, scoped, tag = 'input window, operand 2']
    #allocation5 [shape = 'u8[8192]{0}', space=vmem, size = 0x2000, scoped, tag = 'input window, operand 3']
    #allocation6 [shape = 'u8[32768]{0}', space=vmem, size = 0x8000, scoped, tag = 'output window, operand 0']
    loop: start=0, step=1, limit=12
    $region2: #{double_conv_forward.2} parent=1 // loop_pre_header
      _
    $region3: #{double_conv_forward.2} parent=1 // loop_header
      %s12 = sphi 0, %s16
      %p13 = scmp.ge.s32.totalorder %s12, 12
      %s22 = sphi 0, %s24
      %s25 = sphi 0, %s22
      %s26 = sphi 0, %s25
      %s42 = sphi 0, %s26
      %s56 = sphi 0, %s58
      %s59 = sphi 0, %s56
      %s60 = sphi 0, %s59
      %s76 = sphi 0, %s60
      %s82 = sphi 0, %s84
      %s85 = sphi 0, %s82
      %s86 = sphi 0, %s85
      %s102 = sphi 0, %s86
      %s116 = sphi 0, %s118
      %s119 = sphi 0, %s116
      %s120 = sphi 0, %s119
      %s136 = sphi 0, %s120
      %s140 = sphi 0, %s140
      %s142 = sphi 0, %s140
      %s143 = sphi 0, %s142
      %s157 = sphi 0, %s143
      %s161 = sphi 0, %s161
      %s163 = sphi 0, %s161
      %s164 = sphi 0, %s163
      %s178 = sphi 0, %s164
      %s184 = sphi 0, %s186
      %s187 = sphi 0, %s184
      %s188 = sphi 0, %s187
      %s204 = sphi 0, %s188
    $region4: #{double_conv_forward.2} parent=1 // loop_header_branch
      %15 = sbr.rel (%p13) target = $region8
    $region5: #{double_conv_forward.2} parent=1 // loop_body
      %s17 = ssub.s32 %s12, 1
      %s18 = ssub.s32 %s12, 2
      %s19 = sadd.s32 %s12, 1
      %s20 = ssub.s32 %s12, %s19
      %p21 = scmp.eq.s32.totalorder %s20, 0
      %s23 = sadd.s32 %s22, 1
      %s24 = scalar_select %p21, %s22, %s23
      %p27 = pneg %p21
      %p28 = scmp.eq.s32.totalorder %s12, 9
      %p29 = por %p27, %p28
      %p30 = scmp.ne.s32.totalorder %s22, %s25
      %p31 = scmp.eq.s32.totalorder %s12, 0
      %p32 = por %p30, %p31
      %p33 = scmp.ne.s32.totalorder %s22, %s25
      %p34 = scmp.eq.s32.totalorder %s17, 9
      %p35 = por %p33, %p34
      %p36 = scmp.ne.s32.totalorder %s25, %s26
      %p37 = scmp.eq.s32.totalorder %s17, 0
      %p38 = por %p36, %p37
      %p39 = scmp.ne.s32.totalorder %s25, %s26
      %p40 = scmp.eq.s32.totalorder %s18, 9
      %p41 = por %p39, %p40
      %p43 = scmp.ne.s32.totalorder %s26, %s42
      %p44 = scmp.eq.s32.totalorder %s18, 0
      %p45 = por %p43, %p44
      %s46 = smul.u32 %s12, 2
      %s47 = ssub.s32 %s46, 1
      %p48 = scmp.gt.s32.totalorder %s47, 0
      %s49 = scalar_select %p48, %s47, 0
      %s50 = smul.u32 %s19, 2
      %s51 = ssub.s32 %s50, 1
      %p52 = scmp.gt.s32.totalorder %s51, 0
      %s53 = scalar_select %p52, %s51, 0
      %s54 = ssub.s32 %s49, %s53
      %p55 = scmp.eq.s32.totalorder %s54, 0
      %s57 = sadd.s32 %s56, 1
      %s58 = scalar_select %p55, %s56, %s57
      %p61 = pneg %p55
      %p62 = scmp.eq.s32.totalorder %s12, 9
      %p63 = por %p61, %p62
      %p64 = scmp.ne.s32.totalorder %s56, %s59
      %p65 = scmp.eq.s32.totalorder %s12, 0
      %p66 = por %p64, %p65
      %p67 = scmp.ne.s32.totalorder %s56, %s59
      %p68 = scmp.eq.s32.totalorder %s17, 9
      %p69 = por %p67, %p68
      %p70 = scmp.ne.s32.totalorder %s59, %s60
      %p71 = scmp.eq.s32.totalorder %s17, 0
      %p72 = por %p70, %p71
      %p73 = scmp.ne.s32.totalorder %s59, %s60
      %p74 = scmp.eq.s32.totalorder %s18, 9
      %p75 = por %p73, %p74
      %p77 = scmp.ne.s32.totalorder %s60, %s76
      %p78 = scmp.eq.s32.totalorder %s18, 0
      %p79 = por %p77, %p78
      %s80 = ssub.s32 %s12, %s19
      %p81 = scmp.eq.s32.totalorder %s80, 0
      %s83 = sadd.s32 %s82, 1
      %s84 = scalar_select %p81, %s82, %s83
      %p87 = pneg %p81
      %p88 = scmp.eq.s32.totalorder %s12, 9
      %p89 = por %p87, %p88
      %p90 = scmp.ne.s32.totalorder %s82, %s85
      %p91 = scmp.eq.s32.totalorder %s12, 0
      %p92 = por %p90, %p91
      %p93 = scmp.ne.s32.totalorder %s82, %s85
      %p94 = scmp.eq.s32.totalorder %s17, 9
      %p95 = por %p93, %p94
      %p96 = scmp.ne.s32.totalorder %s85, %s86
      %p97 = scmp.eq.s32.totalorder %s17, 0
      %p98 = por %p96, %p97
      %p99 = scmp.ne.s32.totalorder %s85, %s86
      %p100 = scmp.eq.s32.totalorder %s18, 9
      %p101 = por %p99, %p100
      %p103 = scmp.ne.s32.totalorder %s86, %s102
      %p104 = scmp.eq.s32.totalorder %s18, 0
      %p105 = por %p103, %p104
      %s106 = sadd.s32 %s12, 1
      %s107 = smul.u32 %s106, 2
      %p108 = scmp.lt.s32.totalorder %s107, 19
      %s109 = scalar_select %p108, %s107, 19
      %s110 = sadd.s32 %s19, 1
      %s111 = smul.u32 %s110, 2
      %p112 = scmp.lt.s32.totalorder %s111, 19
      %s113 = scalar_select %p112, %s111, 19
      %s114 = ssub.s32 %s109, %s113
      %p115 = scmp.eq.s32.totalorder %s114, 0
      %s117 = sadd.s32 %s116, 1
      %s118 = scalar_select %p115, %s116, %s117
      %p121 = pneg %p115
      %p122 = scmp.eq.s32.totalorder %s12, 9
      %p123 = por %p121, %p122
      %p124 = scmp.ne.s32.totalorder %s116, %s119
      %p125 = scmp.eq.s32.totalorder %s12, 0
      %p126 = por %p124, %p125
      %p127 = scmp.ne.s32.totalorder %s116, %s119
      %p128 = scmp.eq.s32.totalorder %s17, 9
      %p129 = por %p127, %p128
      %p130 = scmp.ne.s32.totalorder %s119, %s120
      %p131 = scmp.eq.s32.totalorder %s17, 0
      %p132 = por %p130, %p131
      %p133 = scmp.ne.s32.totalorder %s119, %s120
      %p134 = scmp.eq.s32.totalorder %s18, 9
      %p135 = por %p133, %p134
      %p137 = scmp.ne.s32.totalorder %s120, %s136
      %p138 = scmp.eq.s32.totalorder %s18, 0
      %p139 = por %p137, %p138
      %s141 = sadd.s32 %s140, 1
      %p144 = scmp.eq.s32.totalorder %s12, 9
      %p145 = scmp.ne.s32.totalorder %s140, %s142
      %p146 = scmp.eq.s32.totalorder %s12, 0
      %p147 = por %p145, %p146
      %p148 = scmp.ne.s32.totalorder %s140, %s142
      %p149 = scmp.eq.s32.totalorder %s17, 9
      %p150 = por %p148, %p149
      %p151 = scmp.ne.s32.totalorder %s142, %s143
      %p152 = scmp.eq.s32.totalorder %s17, 0
      %p153 = por %p151, %p152
      %p154 = scmp.ne.s32.totalorder %s142, %s143
      %p155 = scmp.eq.s32.totalorder %s18, 9
      %p156 = por %p154, %p155
      %p158 = scmp.ne.s32.totalorder %s143, %s157
      %p159 = scmp.eq.s32.totalorder %s18, 0
      %p160 = por %p158, %p159
      %s162 = sadd.s32 %s161, 1
      %p165 = scmp.eq.s32.totalorder %s12, 9
      %p166 = scmp.ne.s32.totalorder %s161, %s163
      %p167 = scmp.eq.s32.totalorder %s12, 0
      %p168 = por %p166, %p167
      %p169 = scmp.ne.s32.totalorder %s161, %s163
      %p170 = scmp.eq.s32.totalorder %s17, 9
      %p171 = por %p169, %p170
      %p172 = scmp.ne.s32.totalorder %s163, %s164
      %p173 = scmp.eq.s32.totalorder %s17, 0
      %p174 = por %p172, %p173
      %p175 = scmp.ne.s32.totalorder %s163, %s164
      %p176 = scmp.eq.s32.totalorder %s18, 9
      %p177 = por %p175, %p176
      %p179 = scmp.ne.s32.totalorder %s164, %s178
      %p180 = scmp.eq.s32.totalorder %s18, 0
      %p181 = por %p179, %p180
      %s182 = ssub.s32 %s12, %s19
      %p183 = scmp.eq.s32.totalorder %s182, 0
      %s185 = sadd.s32 %s184, 1
      %s186 = scalar_select %p183, %s184, %s185
      %p189 = pneg %p183
      %p190 = scmp.eq.s32.totalorder %s12, 9
      %p191 = por %p189, %p190
      %p192 = scmp.ne.s32.totalorder %s184, %s187
      %p193 = scmp.eq.s32.totalorder %s12, 0
      %p194 = por %p192, %p193
      %p195 = scmp.ne.s32.totalorder %s184, %s187
      %p196 = scmp.eq.s32.totalorder %s17, 9
      %p197 = por %p195, %p196
      %p198 = scmp.ne.s32.totalorder %s187, %s188
      %p199 = scmp.eq.s32.totalorder %s17, 0
      %p200 = por %p198, %p199
      %p201 = scmp.ne.s32.totalorder %s187, %s188
      %p202 = scmp.eq.s32.totalorder %s18, 9
      %p203 = por %p201, %p202
      %p205 = scmp.ne.s32.totalorder %s188, %s204
      %p206 = scmp.eq.s32.totalorder %s18, 0
      %p207 = por %p205, %p206
      %p208 = scmp.le.s32.totalorder 1, %s12
      %p209 = scmp.lt.s32.totalorder %s12, 11
      %p210 = pnand %p208, %p209
      %p211 = pneg %p210
      // Predicated region
      $region9: #{double_conv_forward.2} parent=5 // pred_check
        _
      $region10: #{double_conv_forward.2} parent=5 // pred_check_branch
        %213 = sbr.rel (%p210) target = $region12
      $region11: #{double_conv_forward.2} parent=5 // pred_region
        %s214 = ssub.s32 %s12, 1
        // Predicated region
        $region13: #{double_conv_forward.2} parent=11 // pred_check
          %p215 = pneg %p153
        $region14: #{double_conv_forward.2} parent=11 // pred_check_branch
          %217 = sbr.rel (%p215) target = $region16
        $region15: #{double_conv_forward.2} parent=11 // pred_region
          _
        $region16: #{double_conv_forward.2} parent=11 // pred_fallthru
          _
        // Predicated region
        $region17: #{double_conv_forward.2} parent=11 // pred_check
          %p218 = pneg %p174
        $region18: #{double_conv_forward.2} parent=11 // pred_check_branch
          %220 = sbr.rel (%p218) target = $region20
        $region19: #{double_conv_forward.2} parent=11 // pred_region
          _
        $region20: #{double_conv_forward.2} parent=11 // pred_fallthru
          _
      $region12: #{double_conv_forward.2} parent=5 // pred_fallthru
        _
      %p221 = scmp.lt.s32.totalorder %s12, 10
      // Predicated region
      $region21: #{double_conv_forward.2} parent=5 // pred_check
        %p222 = pneg %p221
      $region22: #{double_conv_forward.2} parent=5 // pred_check_branch
        %224 = sbr.rel (%p222) target = $region24
      $region23: #{double_conv_forward.2} parent=5 // pred_region
        // Predicated region
        $region25: #{double_conv_forward.2} parent=23 // pred_check
          %p225 = pneg %p32
        $region26: #{double_conv_forward.2} parent=23 // pred_check_branch
          %227 = sbr.rel (%p225) target = $region28
        $region27: #{double_conv_forward.2} parent=23 // pred_region
          %s228 = smul.u32 2, %s12
          %p229 = scmp.lt.s32.totalorder %s228, 19
          %s230 = scalar_select %p229, %s228, 19
          %s231 = scalar_lea.vmem %s0, %s230
          %s232 = smul.u32 2, %s12
        $region28: #{double_conv_forward.2} parent=23 // pred_fallthru
          _
        // Predicated region
        $region29: #{double_conv_forward.2} parent=23 // pred_check
          %p233 = pneg %p66
        $region30: #{double_conv_forward.2} parent=23 // pred_check_branch
          %235 = sbr.rel (%p233) target = $region32
        $region31: #{double_conv_forward.2} parent=23 // pred_region
          %s236 = sand.u32 %s56, 1
          %s237 = sand.u32 %s56, 1
          %s238 = smul.addr %s237, 8
          %s239 = scalar_lea.vmem [#allocation3], %s238
          %s240 = smul.u32 %s12, 2
          %s241 = ssub.s32 %s240, 1
          %p242 = scmp.gt.s32.totalorder %s241, 0
          %s243 = scalar_select %p242, %s241, 0
          %s244 = smul.addr %s243, 4
          %s245 = scalar_lea.vmem %s1, %s244
          // Predicated region
          $region33: #{double_conv_forward.2} parent=31 // pred_check
            _
          $region34: #{double_conv_forward.2} parent=31 // pred_check_branch
            %247 = sbr.rel (0) target = $region36
          $region35: #{double_conv_forward.2} parent=31 // pred_region
            // Predicated region
            $region37: #{double_conv_forward.2} parent=35 // pred_check
              _
            $region38: #{double_conv_forward.2} parent=35 // pred_check_branch
              %249 = sbr.rel target = $region40
            $region39: #{double_conv_forward.2} parent=35 // pred_region
              // Predicated region
              $region52: #{double_conv_forward.2} parent=39 // pred_check
                _
              $region53: #{double_conv_forward.2} parent=39 // pred_check_branch
                %266 = sbr.rel (0) target = $region55
              $region54: #{double_conv_forward.2} parent=39 // pred_region
                loop: start=0, step=1, limit=1
                $region56: #{double_conv_forward.2} parent=54 // loop_pre_header
                  _
                $region57: #{double_conv_forward.2} parent=54 // loop_header
                  %s268 = sphi 0, %s272
                  %p269 = scmp.ge.s32.totalorder %s268, 1
                  %s273 = sphi %s245, %s245
                  %s274 = sphi %s239, %s239
                $region58: #{double_conv_forward.2} parent=54 // loop_header_branch
                  %271 = sbr.rel (%p269) target = $region62
                $region59: #{double_conv_forward.2} parent=54 // loop_body
                  _
                $region60: #{double_conv_forward.2} parent=54 // loop_footer
                  %s272 = sadd.s32 1, %s268
                $region61: #{double_conv_forward.2} parent=54 // loop_footer_branch
                  %267 = sbr.rel target = $region57
                $region62: #{double_conv_forward.2} parent=54 // loop_exit
                  _
                loop: start=0, step=1, limit=1
                $region63: #{double_conv_forward.2} parent=54 // loop_pre_header
                  _
                $region64: #{double_conv_forward.2} parent=54 // loop_header
                  %s277 = sphi 0, %s281
                  %p278 = scmp.ge.s32.totalorder %s277, 1
                  %s282 = sphi %s245, %s245
                  %s283 = sphi %s239, %s239
                $region65: #{double_conv_forward.2} parent=54 // loop_header_branch
                  %280 = sbr.rel (%p278) target = $region69
                $region66: #{double_conv_forward.2} parent=54 // loop_body
                  %v284 = vld [vmem:[%s282] sm:$0xf]
                  %285 = vst [vmem:[%s283] sm:$0xf] %v284
                  %v286 = vld [vmem:[%s282 + $0x50] sm:$0xf]
                  %287 = vst [vmem:[%s283 + $0x4] sm:$0xf] %v286
                $region67: #{double_conv_forward.2} parent=54 // loop_footer
                  %s281 = sadd.s32 1, %s277
                $region68: #{double_conv_forward.2} parent=54 // loop_footer_branch
                  %276 = sbr.rel target = $region64
                $region69: #{double_conv_forward.2} parent=54 // loop_exit
                  _
              $region55: #{double_conv_forward.2} parent=39 // pred_fallthru
                _
            $region40: #{double_conv_forward.2} parent=35 // pred_fallthru
              _
            // Predicated region
            $region41: #{double_conv_forward.2} parent=35 // pred_check
              _
            $region42: #{double_conv_forward.2} parent=35 // pred_check_branch
              %251 = sbr.rel (0) target = $region44
            $region43: #{double_conv_forward.2} parent=35 // pred_region
              loop: start=0, step=1, limit=1
              $region45: #{double_conv_forward.2} parent=43 // loop_pre_header
                _
              $region46: #{double_conv_forward.2} parent=43 // loop_header
                %s254 = sphi 0, %s258
                %p255 = scmp.ge.s32.totalorder %s254, 1
                %s259 = sphi %s245, %s245
                %s260 = sphi %s239, %s239
              $region47: #{double_conv_forward.2} parent=43 // loop_header_branch
                %257 = sbr.rel (%p255) target = $region51
              $region48: #{double_conv_forward.2} parent=43 // loop_body
                %v261 = vld [vmem:[%s259] sm:$0xf]
                %262 = vst [vmem:[%s260] sm:$0xf] %v261
                %v263 = vld [vmem:[%s259 + $0x50] sm:$0xf]
                %264 = vst [vmem:[%s260 + $0x4] sm:$0xf] %v263
              $region49: #{double_conv_forward.2} parent=43 // loop_footer
                %s258 = sadd.s32 1, %s254
              $region50: #{double_conv_forward.2} parent=43 // loop_footer_branch
                %253 = sbr.rel target = $region46
              $region51: #{double_conv_forward.2} parent=43 // loop_exit
                _
            $region44: #{double_conv_forward.2} parent=35 // pred_fallthru
              _
          $region36: #{double_conv_forward.2} parent=31 // pred_fallthru
            _
          %288 = vnop
        $region32: #{double_conv_forward.2} parent=23 // pred_fallthru
          _
        // Predicated region
        $region70: #{double_conv_forward.2} parent=23 // pred_check
          %p289 = pneg %p92
        $region71: #{double_conv_forward.2} parent=23 // pred_check_branch
          %291 = sbr.rel (%p289) target = $region73
        $region72: #{double_conv_forward.2} parent=23 // pred_region
          %s292 = sand.u32 %s82, 1
          %s293 = sand.u32 %s82, 1
          %s294 = smul.addr %s293, 16
          %s295 = scalar_lea.vmem [#allocation4], %s294
          %s296 = smul.u32 2, %s12
          %s297 = smul.addr %s296, 4
          %s298 = scalar_lea.vmem %s2, %s297
          // Predicated region
          $region74: #{double_conv_forward.2} parent=72 // pred_check
            _
          $region75: #{double_conv_forward.2} parent=72 // pred_check_branch
            %300 = sbr.rel (0) target = $region77
          $region76: #{double_conv_forward.2} parent=72 // pred_region
            // Predicated region
            $region78: #{double_conv_forward.2} parent=76 // pred_check
              _
            $region79: #{double_conv_forward.2} parent=76 // pred_check_branch
              %302 = sbr.rel (0) target = $region81
            $region80: #{double_conv_forward.2} parent=76 // pred_region
              // Predicated region
              $region93: #{double_conv_forward.2} parent=80 // pred_check
                _
              $region94: #{double_conv_forward.2} parent=80 // pred_check_branch
                %319 = sbr.rel (0) target = $region96
              $region95: #{double_conv_forward.2} parent=80 // pred_region
                loop: start=0, step=1, limit=1
                $region97: #{double_conv_forward.2} parent=95 // loop_pre_header
                  _
                $region98: #{double_conv_forward.2} parent=95 // loop_header
                  %s321 = sphi 0, %s325
                  %p322 = scmp.ge.s32.totalorder %s321, 1
                  %s326 = sphi %s298, %s298
                  %s327 = sphi %s295, %s295
                $region99: #{double_conv_forward.2} parent=95 // loop_header_branch
                  %324 = sbr.rel (%p322) target = $region103
                $region100: #{double_conv_forward.2} parent=95 // loop_body
                  %v328 = vld [vmem:[%s326] sm:$0xff]
                  %329 = vst [vmem:[%s327] sm:$0xff] %v328
                  %v330 = vld [vmem:[%s326 + $0x50] sm:$0xff]
                  %331 = vst [vmem:[%s327 + $0x8] sm:$0xff] %v330
                $region101: #{double_conv_forward.2} parent=95 // loop_footer
                  %s325 = sadd.s32 1, %s321
                $region102: #{double_conv_forward.2} parent=95 // loop_footer_branch
                  %320 = sbr.rel target = $region98
                $region103: #{double_conv_forward.2} parent=95 // loop_exit
                  _
              $region96: #{double_conv_forward.2} parent=80 // pred_fallthru
                _
              // Predicated region
              $region104: #{double_conv_forward.2} parent=80 // pred_check
                _
              $region105: #{double_conv_forward.2} parent=80 // pred_check_branch
                %333 = sbr.rel target = $region107
              $region106: #{double_conv_forward.2} parent=80 // pred_region
                _
              $region107: #{double_conv_forward.2} parent=80 // pred_fallthru
                _
            $region81: #{double_conv_forward.2} parent=76 // pred_fallthru
              _
            // Predicated region
            $region82: #{double_conv_forward.2} parent=76 // pred_check
              _
            $region83: #{double_conv_forward.2} parent=76 // pred_check_branch
              %304 = sbr.rel target = $region85
            $region84: #{double_conv_forward.2} parent=76 // pred_region
              loop: start=0, step=1, limit=1
              $region86: #{double_conv_forward.2} parent=84 // loop_pre_header
                _
              $region87: #{double_conv_forward.2} parent=84 // loop_header
                %s307 = sphi 0, %s311
                %p308 = scmp.ge.s32.totalorder %s307, 1
                %s312 = sphi %s298, %s298
                %s313 = sphi %s295, %s295
              $region88: #{double_conv_forward.2} parent=84 // loop_header_branch
                %310 = sbr.rel (%p308) target = $region92
              $region89: #{double_conv_forward.2} parent=84 // loop_body
                %v314 = vld [vmem:[%s312] sm:$0xff]
                %315 = vst [vmem:[%s313] sm:$0xff] %v314
                %v316 = vld [vmem:[%s312 + $0x50] sm:$0xff]
                %317 = vst [vmem:[%s313 + $0x8] sm:$0xff] %v316
              $region90: #{double_conv_forward.2} parent=84 // loop_footer
                %s311 = sadd.s32 1, %s307
              $region91: #{double_conv_forward.2} parent=84 // loop_footer_branch
                %306 = sbr.rel target = $region87
              $region92: #{double_conv_forward.2} parent=84 // loop_exit
                _
            $region85: #{double_conv_forward.2} parent=76 // pred_fallthru
              _
          $region77: #{double_conv_forward.2} parent=72 // pred_fallthru
            _
          %334 = vnop
        $region73: #{double_conv_forward.2} parent=23 // pred_fallthru
          _
        // Predicated region
        $region108: #{double_conv_forward.2} parent=23 // pred_check
          %p335 = pneg %p126
        $region109: #{double_conv_forward.2} parent=23 // pred_check_branch
          %337 = sbr.rel (%p335) target = $region111
        $region110: #{double_conv_forward.2} parent=23 // pred_region
          %s338 = sand.u32 %s116, 1
          %s339 = sand.u32 %s116, 1
          %s340 = smul.addr %s339, 8
          %s341 = scalar_lea.vmem [#allocation5], %s340
          %s342 = sadd.s32 %s12, 1
          %s343 = smul.u32 %s342, 2
          %p344 = scmp.lt.s32.totalorder %s343, 19
          %s345 = scalar_select %p344, %s343, 19
          %s346 = smul.addr %s345, 4
          %s347 = scalar_lea.vmem %s3, %s346
          // Predicated region
          $region112: #{double_conv_forward.2} parent=110 // pred_check
            _
          $region113: #{double_conv_forward.2} parent=110 // pred_check_branch
            %349 = sbr.rel (0) target = $region115
          $region114: #{double_conv_forward.2} parent=110 // pred_region
            // Predicated region
            $region116: #{double_conv_forward.2} parent=114 // pred_check
              _
            $region117: #{double_conv_forward.2} parent=114 // pred_check_branch
              %351 = sbr.rel target = $region119
            $region118: #{double_conv_forward.2} parent=114 // pred_region
              // Predicated region
              $region131: #{double_conv_forward.2} parent=118 // pred_check
                _
              $region132: #{double_conv_forward.2} parent=118 // pred_check_branch
                %368 = sbr.rel (0) target = $region134
              $region133: #{double_conv_forward.2} parent=118 // pred_region
                loop: start=0, step=1, limit=1
                $region135: #{double_conv_forward.2} parent=133 // loop_pre_header
                  _
                $region136: #{double_conv_forward.2} parent=133 // loop_header
                  %s370 = sphi 0, %s374
                  %p371 = scmp.ge.s32.totalorder %s370, 1
                  %s375 = sphi %s347, %s347
                  %s376 = sphi %s341, %s341
                $region137: #{double_conv_forward.2} parent=133 // loop_header_branch
                  %373 = sbr.rel (%p371) target = $region141
                $region138: #{double_conv_forward.2} parent=133 // loop_body
                  _
                $region139: #{double_conv_forward.2} parent=133 // loop_footer
                  %s374 = sadd.s32 1, %s370
                $region140: #{double_conv_forward.2} parent=133 // loop_footer_branch
                  %369 = sbr.rel target = $region136
                $region141: #{double_conv_forward.2} parent=133 // loop_exit
                  _
                loop: start=0, step=1, limit=1
                $region142: #{double_conv_forward.2} parent=133 // loop_pre_header
                  _
                $region143: #{double_conv_forward.2} parent=133 // loop_header
                  %s379 = sphi 0, %s383
                  %p380 = scmp.ge.s32.totalorder %s379, 1
                  %s384 = sphi %s347, %s347
                  %s385 = sphi %s341, %s341
                $region144: #{double_conv_forward.2} parent=133 // loop_header_branch
                  %382 = sbr.rel (%p380) target = $region148
                $region145: #{double_conv_forward.2} parent=133 // loop_body
                  %v386 = vld [vmem:[%s384] sm:$0xf]
                  %387 = vst [vmem:[%s385] sm:$0xf] %v386
                  %v388 = vld [vmem:[%s384 + $0x50] sm:$0xf]
                  %389 = vst [vmem:[%s385 + $0x4] sm:$0xf] %v388
                $region146: #{double_conv_forward.2} parent=133 // loop_footer
                  %s383 = sadd.s32 1, %s379
                $region147: #{double_conv_forward.2} parent=133 // loop_footer_branch
                  %378 = sbr.rel target = $region143
                $region148: #{double_conv_forward.2} parent=133 // loop_exit
                  _
              $region134: #{double_conv_forward.2} parent=118 // pred_fallthru
                _
            $region119: #{double_conv_forward.2} parent=114 // pred_fallthru
              _
            // Predicated region
            $region120: #{double_conv_forward.2} parent=114 // pred_check
              _
            $region121: #{double_conv_forward.2} parent=114 // pred_check_branch
              %353 = sbr.rel (0) target = $region123
            $region122: #{double_conv_forward.2} parent=114 // pred_region
              loop: start=0, step=1, limit=1
              $region124: #{double_conv_forward.2} parent=122 // loop_pre_header
                _
              $region125: #{double_conv_forward.2} parent=122 // loop_header
                %s356 = sphi 0, %s360
                %p357 = scmp.ge.s32.totalorder %s356, 1
                %s361 = sphi %s347, %s347
                %s362 = sphi %s341, %s341
              $region126: #{double_conv_forward.2} parent=122 // loop_header_branch
                %359 = sbr.rel (%p357) target = $region130
              $region127: #{double_conv_forward.2} parent=122 // loop_body
                %v363 = vld [vmem:[%s361] sm:$0xf]
                %364 = vst [vmem:[%s362] sm:$0xf] %v363
                %v365 = vld [vmem:[%s361 + $0x50] sm:$0xf]
                %366 = vst [vmem:[%s362 + $0x4] sm:$0xf] %v365
              $region128: #{double_conv_forward.2} parent=122 // loop_footer
                %s360 = sadd.s32 1, %s356
              $region129: #{double_conv_forward.2} parent=122 // loop_footer_branch
                %355 = sbr.rel target = $region125
              $region130: #{double_conv_forward.2} parent=122 // loop_exit
                _
            $region123: #{double_conv_forward.2} parent=114 // pred_fallthru
              _
          $region115: #{double_conv_forward.2} parent=110 // pred_fallthru
            _
          %390 = vnop
        $region111: #{double_conv_forward.2} parent=23 // pred_fallthru
          _
      $region24: #{double_conv_forward.2} parent=5 // pred_fallthru
        _
      %p391 = scmp.le.s32.totalorder 1, %s12
      %p392 = scmp.lt.s32.totalorder %s12, 11
      %p393 = pnand %p391, %p392
      %p394 = pneg %p393
      // Predicated region
      $region149: #{double_conv_forward.2} parent=5 // pred_check
        _
      $region150: #{double_conv_forward.2} parent=5 // pred_check_branch
        %396 = sbr.rel (%p393) target = $region152
      $region151: #{double_conv_forward.2} parent=5 // pred_region
        %s397 = ssub.s32 %s12, 1
        %s398 = sand.u32 %s59, 1
        %s399 = sand.u32 %s59, 1
        %s400 = smul.addr %s399, 8
        %s401 = scalar_lea.vmem [#allocation3], %s400
        // Predicated region
        $region153: #{double_conv_forward.2} parent=151 // pred_check
          %p402 = pneg %p72
        $region154: #{double_conv_forward.2} parent=151 // pred_check_branch
          %404 = sbr.rel (%p402) target = $region156
        $region155: #{double_conv_forward.2} parent=151 // pred_region
          _
        $region156: #{double_conv_forward.2} parent=151 // pred_fallthru
          _
        %s405 = sand.u32 %s85, 1
        %s406 = sand.u32 %s85, 1
        %s407 = smul.addr %s406, 16
        %s408 = scalar_lea.vmem [#allocation4], %s407
        // Predicated region
        $region157: #{double_conv_forward.2} parent=151 // pred_check
          %p409 = pneg %p98
        $region158: #{double_conv_forward.2} parent=151 // pred_check_branch
          %411 = sbr.rel (%p409) target = $region160
        $region159: #{double_conv_forward.2} parent=151 // pred_region
          _
        $region160: #{double_conv_forward.2} parent=151 // pred_fallthru
          _
        %s412 = sand.u32 %s119, 1
        %s413 = sand.u32 %s119, 1
        %s414 = smul.addr %s413, 8
        %s415 = scalar_lea.vmem [#allocation5], %s414
        // Predicated region
        $region161: #{double_conv_forward.2} parent=151 // pred_check
          %p416 = pneg %p132
        $region162: #{double_conv_forward.2} parent=151 // pred_check_branch
          %418 = sbr.rel (%p416) target = $region164
        $region163: #{double_conv_forward.2} parent=151 // pred_region
          _
        $region164: #{double_conv_forward.2} parent=151 // pred_fallthru
          _
        %s419 = smul.u32 2, %s17
        %p420 = scmp.lt.s32.totalorder %s419, 19
        %s421 = scalar_select %p420, %s419, 19
        %s422 = scalar_lea.vmem %s0, %s421
        %p423 = pneg %p38
        %p424 = pneg %p35
        %s425 = sand.u32 %s59, 1
        %s426 = sand.u32 %s59, 1
        %s427 = smul.addr %s426, 8
        %s428 = scalar_lea.vmem [#allocation3], %s427
        %p429 = pneg %p72
        %p430 = pneg %p69
        %s431 = sand.u32 %s85, 1
        %s432 = sand.u32 %s85, 1
        %s433 = smul.addr %s432, 16
        %s434 = scalar_lea.vmem [#allocation4], %s433
        %p435 = pneg %p98
        %p436 = pneg %p95
        %s437 = sand.u32 %s119, 1
        %s438 = sand.u32 %s119, 1
        %s439 = smul.addr %s438, 8
        %s440 = scalar_lea.vmem [#allocation5], %s439
        %p441 = pneg %p132
        %p442 = pneg %p129
        %p443 = pneg %p153
        %p444 = pneg %p150
        %p445 = pneg %p174
        %p446 = pneg %p171
        %p447 = pneg %p200
        %p448 = pneg %p197
        %s449 = sand.u32 %s187, 1
        %s450 = sand.u32 %s187, 1
        %s451 = smul.addr %s450, 32
        %s452 = scalar_lea.vmem [#allocation6], %s451
        %s453 = smul.u32 2, %s17
        %p454 = scmp.lt.s32.totalorder %s453, 19
        %s455 = scalar_select %p454, %s453, 19
        %s456 = scalar_lea.vmem %s0, %s455
        %s457 = smul.u32 2, %s17
        %s458 = smul.u32 %s17, 2
        %s459 = ssub.s32 %s458, 1
        %p460 = scmp.gt.s32.totalorder %s459, 0
        %s461 = scalar_select %p460, %s459, 0
        %s462 = smul.u32 2, %s17
        %s463 = sadd.s32 %s17, 1
        %s464 = smul.u32 %s463, 2
        %p465 = scmp.lt.s32.totalorder %s464, 19
        %s466 = scalar_select %p465, %s464, 19
        %s467 = smul.u32 2, %s17
        %v469 = vld [vmem:[%s401] sm:$0xf]
        %v470 = vld [vmem:[%s401 + $0x4] sm:$0xf]
        %v471 = vld [vmem:[%s408] sm:$0xff]
        %v472 = vld [vmem:[%s408 + $0x8] sm:$0xff]
        %v473 = vld [vmem:[%s415] sm:$0xf]
        %v474 = vld [vmem:[%s415 + $0x4] sm:$0xf]
        %v477 = vunpack.c.l.b16 %v469
        %v478 = vunpack.c.l.b16 %v470
        %v479 = vpack.c.b16 %v478, %v477
        %480 = vrot.lane.b32.xlu0 %v479, 35
        %v481 = vpop.permute.xlu0 %480
        %v484 = vunpack.c.l.b16 %v471
        %v485 = vunpack.c.h.b16 %v471
        %v486 = vunpack.c.l.b16 %v472
        %v487 = vunpack.c.h.b16 %v472
        %v488 = vpack.c.b16 %v486, %v484
        %v489 = vpack.c.b16 %v487, %v485
        %490 = vrot.lane.b32.xlu0 %v488, 35
        %v491 = vpop.permute.xlu0 %490
        %492 = vrot.lane.b32.xlu0 %v489, 35
        %v493 = vpop.permute.xlu0 %492
        %vm494 = vcmask 285696
        %v495 = vsel %vm494, %v491, %v493
        %vm497 = vcmask 285696
        %v500 = vsel %vm497, %v481, %v491
        %502 = vst [vmem:[#allocation2] sm:$0xff] %v500
        %503 = vst [vmem:[#allocation2 + $0x8] sm:$0xff] %v495
        %504 = vrot.lane.b32.xlu0 %v479, 34
        %v505 = vpop.permute.xlu0 %504
        %506 = vrot.lane.b32.xlu0 %v488, 34
        %v507 = vpop.permute.xlu0 %506
        %508 = vrot.lane.b32.xlu0 %v489, 34
        %v509 = vpop.permute.xlu0 %508
        %vm510 = vcmask 277504
        %v511 = vsel %vm510, %v507, %v509
        %vm513 = vcmask 277504
        %v516 = vsel %vm513, %v505, %v507
        %518 = vst [vmem:[#allocation2 + $0x10] sm:$0xff] %v516
        %519 = vst [vmem:[#allocation2 + $0x18] sm:$0xff] %v511
        %520 = vrot.lane.b32.xlu0 %v479, 33
        %v521 = vpop.permute.xlu0 %520
        %522 = vrot.lane.b32.xlu0 %v488, 33
        %v523 = vpop.permute.xlu0 %522
        %524 = vrot.lane.b32.xlu0 %v489, 33
        %v525 = vpop.permute.xlu0 %524
        %vm526 = vcmask 269312
        %v527 = vsel %vm526, %v523, %v525
        %vm529 = vcmask 269312
        %v532 = vsel %vm529, %v521, %v523
        %534 = vst [vmem:[#allocation2 + $0x20] sm:$0xff] %v532
        %535 = vst [vmem:[#allocation2 + $0x28] sm:$0xff] %v527
        %536 = vrot.lane.b32.xlu0 %v479, 1
        %v537 = vpop.permute.xlu0 %536
        %538 = vrot.lane.b32.xlu0 %v488, 1
        %v539 = vpop.permute.xlu0 %538
        %540 = vrot.lane.b32.xlu0 %v489, 1
        %v541 = vpop.permute.xlu0 %540
        %vm542 = vcmask 7168
        %v543 = vsel %vm542, %v539, %v541
        %vm545 = vcmask 7168
        %v548 = vsel %vm545, %v537, %v539
        %550 = vst [vmem:[#allocation2 + $0x30] sm:$0xff] %v548
        %551 = vst [vmem:[#allocation2 + $0x38] sm:$0xff] %v543
        %554 = vst [vmem:[#allocation2 + $0x40] sm:$0xff] %v488
        %555 = vst [vmem:[#allocation2 + $0x48] sm:$0xff] %v489
        %556 = vrot.lane.b32.xlu0 %v488, 127
        %v557 = vpop.permute.xlu0 %556
        %558 = vrot.lane.b32.xlu0 %v489, 127
        %v559 = vpop.permute.xlu0 %558
        %vm560 = vcmask 1039360
        %v561 = vsel %vm560, %v557, %v559
        %v565 = vunpack.c.l.b16 %v473
        %v566 = vunpack.c.l.b16 %v474
        %v567 = vpack.c.b16 %v566, %v565
        %568 = vrot.lane.b32.xlu0 %v567, 127
        %v569 = vpop.permute.xlu0 %568
        %vm570 = vcmask 1039360
        %v573 = vsel %vm570, %v559, %v569
        %575 = vst [vmem:[#allocation2 + $0x50] sm:$0xff] %v561
        %576 = vst [vmem:[#allocation2 + $0x58] sm:$0xff] %v573
        %577 = vrot.lane.b32.xlu0 %v488, 95
        %v578 = vpop.permute.xlu0 %577
        %579 = vrot.lane.b32.xlu0 %v489, 95
        %v580 = vpop.permute.xlu0 %579
        %vm581 = vcmask 777216
        %v582 = vsel %vm581, %v578, %v580
        %584 = vrot.lane.b32.xlu0 %v567, 95
        %v585 = vpop.permute.xlu0 %584
        %vm586 = vcmask 777216
        %v589 = vsel %vm586, %v580, %v585
        %591 = vst [vmem:[#allocation2 + $0x60] sm:$0xff] %v582
        %592 = vst [vmem:[#allocation2 + $0x68] sm:$0xff] %v589
        %593 = vrot.lane.b32.xlu0 %v488, 94
        %v594 = vpop.permute.xlu0 %593
        %595 = vrot.lane.b32.xlu0 %v489, 94
        %v596 = vpop.permute.xlu0 %595
        %vm597 = vcmask 769024
        %v598 = vsel %vm597, %v594, %v596
        %600 = vrot.lane.b32.xlu0 %v567, 94
        %v601 = vpop.permute.xlu0 %600
        %vm602 = vcmask 769024
        %v605 = vsel %vm602, %v596, %v601
        %607 = vst [vmem:[#allocation2 + $0x70] sm:$0xff] %v598
        %608 = vst [vmem:[#allocation2 + $0x78] sm:$0xff] %v605
        %609 = vrot.lane.b32.xlu0 %v488, 93
        %v610 = vpop.permute.xlu0 %609
        %611 = vrot.lane.b32.xlu0 %v489, 93
        %v612 = vpop.permute.xlu0 %611
        %vm613 = vcmask 760832
        %v614 = vsel %vm613, %v610, %v612
        %616 = vrot.lane.b32.xlu0 %v567, 93
        %v617 = vpop.permute.xlu0 %616
        %vm618 = vcmask 760832
        %v621 = vsel %vm618, %v612, %v617
        %623 = vst [vmem:[#allocation2 + $0x80] sm:$0xff] %v614
        %624 = vst [vmem:[#allocation2 + $0x88] sm:$0xff] %v621
        %v625 = vld [vmem:[%s4] sm:$0xff]
        %v626 = vld [vmem:[%s4 + $0x8] sm:$0xff]
        %v627 = vld [vmem:[%s4 + $0x10] sm:$0xff]
        %v628 = vld [vmem:[%s4 + $0x18] sm:$0xff]
        %v629 = vld [vmem:[#allocation2] sm:$0xff]
        %v630 = vld [vmem:[#allocation2 + $0x8] sm:$0xff]
        %v631 = vld [vmem:[#allocation2 + $0x10] sm:$0xff]
        %v632 = vld [vmem:[#allocation2 + $0x18] sm:$0xff]
        %v633 = vld [vmem:[#allocation2 + $0x20] sm:$0xff]
        %v634 = vld [vmem:[#allocation2 + $0x28] sm:$0xff]
        %v635 = vld [vmem:[#allocation2 + $0x30] sm:$0xff]
        %v636 = vld [vmem:[#allocation2 + $0x38] sm:$0xff]
        %v637 = vld [vmem:[#allocation2 + $0x40] sm:$0xff]
        %v638 = vld [vmem:[#allocation2 + $0x48] sm:$0xff]
        %v639 = vld [vmem:[#allocation2 + $0x50] sm:$0xff]
        %v640 = vld [vmem:[#allocation2 + $0x58] sm:$0xff]
        %v641 = vld [vmem:[#allocation2 + $0x60] sm:$0xff]
        %v642 = vld [vmem:[#allocation2 + $0x68] sm:$0xff]
        %v643 = vld [vmem:[#allocation2 + $0x70] sm:$0xff]
        %v644 = vld [vmem:[#allocation2 + $0x78] sm:$0xff]
        %v645 = vld [vmem:[#allocation2 + $0x80] sm:$0xff]
        %v646 = vld [vmem:[#allocation2 + $0x88] sm:$0xff]
        %v647 = vld [vmem:[%s5] sm:$0xff]
        %v648 = vld [vmem:[%s5 + $0x8] sm:$0xff]
        %v649 = vld [vmem:[%s5 + $0x10] sm:$0xff]
        %v650 = vld [vmem:[%s5 + $0x18] sm:$0xff]
        %652 = vset.pattern.permute.xlu0 0
        %653 = vperm.xlu0 %652, %v647
        %v654 = vpop.permute.xlu0 %653
        %657 = vset.pattern.permute.xlu0 0
        %658 = vperm.xlu0 %657, %v648
        %v659 = vpop.permute.xlu0 %658
        %662 = vset.pattern.permute.xlu0 0
        %663 = vperm.xlu0 %662, %v649
        %v664 = vpop.permute.xlu0 %663
        %667 = vset.pattern.permute.xlu0 0
        %668 = vperm.xlu0 %667, %v650
        %v669 = vpop.permute.xlu0 %668
        %v675 = vunpack.c.l.b16 %v625
        %v676 = vunpack.c.h.b16 %v625
        %v677 = vunpack.c.l.b16 %v626
        %v678 = vunpack.c.h.b16 %v626
        %v679 = vunpack.c.l.b16 %v627
        %v680 = vunpack.c.h.b16 %v627
        %v681 = vunpack.c.l.b16 %v628
        %v682 = vunpack.c.h.b16 %v628
        %v683 = vpack.c.b16 %v677, %v675
        %v684 = vpack.c.b16 %v678, %v676
        %v685 = vpack.c.b16 %v681, %v679
        %v686 = vpack.c.b16 %v682, %v680
        %vm689 = vcmask 130048
        %v691 = vsel %vm689, %v684, 0
        %v694 = vsel %vm689, %v686, 0
        %696 = vmatprep.subr.bf16.mxu0 %v630
        %697 = vmatpush1.bf16.msra.mxu0 %v629
        %698 = vmatprep.subr.bf16.mxu0 %v632
        %699 = vmatpush1.bf16.msra.mxu0 %v631
        %700 = vmatprep.subr.bf16.mxu0 %v634
        %701 = vmatpush1.bf16.msra.mxu0 %v633
        %702 = vmatprep.subr.bf16.mxu0 %v636
        %703 = vmatpush1.bf16.msra.mxu0 %v635
        %704 = vmatprep.subr.bf16.mxu0 %v638
        %705 = vmatpush1.bf16.msra.mxu0 %v637
        %706 = vmatprep.subr.bf16.mxu0 %v640
        %707 = vmatpush1.bf16.msra.mxu0 %v639
        %708 = vmatprep.subr.bf16.mxu0 %v642
        %709 = vmatpush1.bf16.msra.mxu0 %v641
        %710 = vmatprep.subr.bf16.mxu0 %v644
        %711 = vmatpush1.bf16.msra.mxu0 %v643
        %712 = vmatprep.subr.bf16.mxu0 %v646
        %713 = vmatpush1.bf16.msra.mxu0 %v645
        %714 = vmatprep.subr.bf16.mxu0 0
        %715 = vmatpush1.bf16.msra.mxu0 0
        %716 = vmatprep.subr.bf16.mxu0 0
        %717 = vmatpush1.bf16.msra.mxu0 0
        %718 = vmatprep.subr.bf16.mxu0 0
        %719 = vmatpush1.bf16.msra.mxu0 0
        %720 = vmatprep.subr.bf16.mxu0 0
        %721 = vmatpush1.bf16.msra.mxu0 0
        %722 = vmatprep.subr.bf16.mxu0 0
        %723 = vmatpush1.bf16.msra.mxu0 0
        %724 = vmatprep.subr.bf16.mxu0 0
        %725 = vmatpush1.bf16.msra.mxu0 0
        %726 = vmatprep.subr.bf16.mxu0 0
        %727 = vmatpush1.bf16.msra.mxu0 0
        %728 = vmatprep.mubr.bf16.mxu0 %v691
        %729 = vmatmul.mubr.bf16.gmra.mrb[0].mxu0 %v683
        %v730 = vpop.f32.mrb[0].mxu0
        %v731 = vadd.f32 %v654, %v730
        %v732 = vpop.f32.mrb[0].mxu0
        %v733 = vadd.f32 %v654, %v732
        %v734 = vpop.f32.mrb[0].mxu0
        %v735 = vadd.f32 %v659, %v734
        %v736 = vpop.f32.mrb[0].mxu0
        %v737 = vadd.f32 %v659, %v736
        %738 = vmatprep.mubr.bf16.mxu0 %v694
        %739 = vmatmul.mubr.bf16.gmra.mrb[0].mxu0 %v685
        %v740 = vpop.f32.mrb[0].mxu0
        %v741 = vadd.f32 %v664, %v740
        %v742 = vpop.f32.mrb[0].mxu0
        %v743 = vadd.f32 %v664, %v742
        %v744 = vpop.f32.mrb[0].mxu0
        %v745 = vadd.f32 %v669, %v744
        %v746 = vpop.f32.mrb[0].mxu0
        %v747 = vadd.f32 %v669, %v746
        %748 = vdwg.mxu0
        %v749 = vmax.f32 %v731, 0.0
        %v750 = vmax.f32 %v733, 0.0
        %v751 = vmax.f32 %v735, 0.0
        %v752 = vmax.f32 %v737, 0.0
        %v753 = vmax.f32 %v741, 0.0
        %v754 = vmax.f32 %v743, 0.0
        %v755 = vmax.f32 %v745, 0.0
        %v756 = vmax.f32 %v747, 0.0
        %v757 = vld [vmem:[%s456] sm:$0x3]
        %v759 = vlaneseq
        %v760 = vshrl.u32 %v759, 7
        %v761 = vsub.s32 0, %v760
        %v762 = vrot.slane %v757, %v761
        %v763 = vlaneseq
        %v764 = vshrl.u32 %v763, 7
        %v765 = vsub.s32 1, %v764
        %v766 = vrot.slane %v757, %v765
        %v769 = vmul.f32 %v749, %v762
        %v770 = vmul.f32 %v750, %v766
        %v771 = vmul.f32 %v751, %v762
        %v772 = vmul.f32 %v752, %v766
        %v773 = vmul.f32 %v753, %v762
        %v774 = vmul.f32 %v754, %v766
        %v775 = vmul.f32 %v755, %v762
        %v776 = vmul.f32 %v756, %v766
        %v777 = vpack.c.bf16 %v771, %v769
        %v778 = vpack.c.bf16 %v772, %v770
        %v779 = vpack.c.bf16 %v775, %v773
        %v780 = vpack.c.bf16 %v776, %v774
        %v785 = vunpack.c.l.b16 %v777
        %v786 = vunpack.c.l.b16 %v778
        %v787 = vunpack.c.h.b16 %v777
        %v788 = vunpack.c.h.b16 %v778
        %v789 = vunpack.c.l.b16 %v779
        %v790 = vunpack.c.l.b16 %v780
        %v791 = vunpack.c.h.b16 %v779
        %v792 = vunpack.c.h.b16 %v780
        %v793 = vpack.c.b16 %v786, %v785
        %v794 = vpack.c.b16 %v788, %v787
        %v795 = vpack.c.b16 %v790, %v789
        %v796 = vpack.c.b16 %v792, %v791
        %801 = vst [vmem:[%s452] sm:$0xff] %v793
        %802 = vst [vmem:[%s452 + $0x8] sm:$0xff] %v794
        %803 = vst [vmem:[%s452 + $0x10] sm:$0xff] %v795
        %804 = vst [vmem:[%s452 + $0x18] sm:$0xff] %v796
        %s805 = sand.u32 %s187, 1
        %s806 = sand.u32 %s187, 1
        %s807 = smul.addr %s806, 32
        %s808 = scalar_lea.vmem [#allocation6], %s807
        // Predicated region
        $region165: #{double_conv_forward.2} parent=151 // pred_check
          %p809 = pneg %p197
        $region166: #{double_conv_forward.2} parent=151 // pred_check_branch
          %811 = sbr.rel (%p809) target = $region168
        $region167: #{double_conv_forward.2} parent=151 // pred_region
          %s812 = smul.u32 2, %s17
          %s813 = smul.addr %s812, 4
          %s814 = scalar_lea.vmem %s6, %s813
          // Predicated region
          $region169: #{double_conv_forward.2} parent=167 // pred_check
            _
          $region170: #{double_conv_forward.2} parent=167 // pred_check_branch
            %816 = sbr.rel (0) target = $region172
          $region171: #{double_conv_forward.2} parent=167 // pred_region
            // Predicated region
            $region173: #{double_conv_forward.2} parent=171 // pred_check
              _
            $region174: #{double_conv_forward.2} parent=171 // pred_check_branch
              %818 = sbr.rel (0) target = $region176
            $region175: #{double_conv_forward.2} parent=171 // pred_region
              // Predicated region
              $region188: #{double_conv_forward.2} parent=175 // pred_check
                _
              $region189: #{double_conv_forward.2} parent=175 // pred_check_branch
                %839 = sbr.rel (0) target = $region191
              $region190: #{double_conv_forward.2} parent=175 // pred_region
                loop: start=0, step=1, limit=1
                $region192: #{double_conv_forward.2} parent=190 // loop_pre_header
                  _
                $region193: #{double_conv_forward.2} parent=190 // loop_header
                  %s841 = sphi 0, %s845
                  %p842 = scmp.ge.s32.totalorder %s841, 1
                  %s846 = sphi %s808, %s808
                  %s847 = sphi %s814, %s814
                $region194: #{double_conv_forward.2} parent=190 // loop_header_branch
                  %844 = sbr.rel (%p842) target = $region198
                $region195: #{double_conv_forward.2} parent=190 // loop_body
                  %v848 = vld [vmem:[%s846] sm:$0xff]
                  %849 = vst [vmem:[%s847] sm:$0xff] %v848
                  %v850 = vld [vmem:[%s846 + $0x8] sm:$0xff]
                  %851 = vst [vmem:[%s847 + $0x50] sm:$0xff] %v850
                  %v852 = vld [vmem:[%s846 + $0x10] sm:$0xff]
                  %853 = vst [vmem:[%s847 + $0xa0] sm:$0xff] %v852
                  %v854 = vld [vmem:[%s846 + $0x18] sm:$0xff]
                  %855 = vst [vmem:[%s847 + $0xf0] sm:$0xff] %v854
                $region196: #{double_conv_forward.2} parent=190 // loop_footer
                  %s845 = sadd.s32 1, %s841
                $region197: #{double_conv_forward.2} parent=190 // loop_footer_branch
                  %840 = sbr.rel target = $region193
                $region198: #{double_conv_forward.2} parent=190 // loop_exit
                  _
              $region191: #{double_conv_forward.2} parent=175 // pred_fallthru
                _
              // Predicated region
              $region199: #{double_conv_forward.2} parent=175 // pred_check
                _
              $region200: #{double_conv_forward.2} parent=175 // pred_check_branch
                %857 = sbr.rel target = $region202
              $region201: #{double_conv_forward.2} parent=175 // pred_region
                _
              $region202: #{double_conv_forward.2} parent=175 // pred_fallthru
                _
            $region176: #{double_conv_forward.2} parent=171 // pred_fallthru
              _
            // Predicated region
            $region177: #{double_conv_forward.2} parent=171 // pred_check
              _
            $region178: #{double_conv_forward.2} parent=171 // pred_check_branch
              %820 = sbr.rel target = $region180
            $region179: #{double_conv_forward.2} parent=171 // pred_region
              loop: start=0, step=1, limit=1
              $region181: #{double_conv_forward.2} parent=179 // loop_pre_header
                _
              $region182: #{double_conv_forward.2} parent=179 // loop_header
                %s823 = sphi 0, %s827
                %p824 = scmp.ge.s32.totalorder %s823, 1
                %s828 = sphi %s808, %s808
                %s829 = sphi %s814, %s814
              $region183: #{double_conv_forward.2} parent=179 // loop_header_branch
                %826 = sbr.rel (%p824) target = $region187
              $region184: #{double_conv_forward.2} parent=179 // loop_body
                %v830 = vld [vmem:[%s828] sm:$0xff]
                %831 = vst [vmem:[%s829] sm:$0xff] %v830
                %v832 = vld [vmem:[%s828 + $0x8] sm:$0xff]
                %833 = vst [vmem:[%s829 + $0x50] sm:$0xff] %v832
                %v834 = vld [vmem:[%s828 + $0x10] sm:$0xff]
                %835 = vst [vmem:[%s829 + $0xa0] sm:$0xff] %v834
                %v836 = vld [vmem:[%s828 + $0x18] sm:$0xff]
                %837 = vst [vmem:[%s829 + $0xf0] sm:$0xff] %v836
              $region185: #{double_conv_forward.2} parent=179 // loop_footer
                %s827 = sadd.s32 1, %s823
              $region186: #{double_conv_forward.2} parent=179 // loop_footer_branch
                %822 = sbr.rel target = $region182
              $region187: #{double_conv_forward.2} parent=179 // loop_exit
                _
            $region180: #{double_conv_forward.2} parent=171 // pred_fallthru
              _
          $region172: #{double_conv_forward.2} parent=167 // pred_fallthru
            _
          %858 = vnop
        $region168: #{double_conv_forward.2} parent=151 // pred_fallthru
          _
      $region152: #{double_conv_forward.2} parent=5 // pred_fallthru
        _
      %p859 = scmp.le.s32.totalorder 2, %s12
      // Predicated region
      $region203: #{double_conv_forward.2} parent=5 // pred_check
        %p860 = pneg %p859
      $region204: #{double_conv_forward.2} parent=5 // pred_check_branch
        %862 = sbr.rel (%p860) target = $region206
      $region205: #{double_conv_forward.2} parent=5 // pred_region
        %s863 = ssub.s32 %s12, 2
        // Predicated region
        $region207: #{double_conv_forward.2} parent=205 // pred_check
          %p864 = pneg %p203
        $region208: #{double_conv_forward.2} parent=205 // pred_check_branch
          %866 = sbr.rel (%p864) target = $region210
        $region209: #{double_conv_forward.2} parent=205 // pred_region
          %s867 = sand.u32 %s188, 1
          %s868 = sand.u32 %s188, 1
          %s869 = smul.addr %s868, 32
          %s870 = scalar_lea.vmem [#allocation6], %s869
        $region210: #{double_conv_forward.2} parent=205 // pred_fallthru
          _
      $region206: #{double_conv_forward.2} parent=5 // pred_fallthru
        _
    $region6: #{double_conv_forward.2} parent=1 // loop_footer
      %s16 = sadd.s32 1, %s12
    $region7: #{double_conv_forward.2} parent=1 // loop_footer_branch
      %11 = sbr.rel target = $region3
    $region8: #{double_conv_forward.2} parent=1 // loop_exit
      _

// kernel: double_conv_forward.3
$region0: #{double_conv_forward.3}
  #allocation0 [shape = 'u32[]', space=smem, size = 0x4, offset = 0x4, fixed_abs, tag = 'smem constant byte address 0x4 - core index']
  #allocation1 [shape = 'u32[144,128]{1,0:T(1,128)}', space=vmem, size = 0x12000, scoped, tag = 'internal scratch']
  #allocation2 [shape = 'bf16[288,256]{1,0:T(16,128)(2,1)}', space=vmem, size = 0x24000, scoped, tag = 'scratch operand']
  %s0 = inlined_call_operand.vmem [shape: f32[1,2560], index: 0, kind: input, shape index: {}]
  %s1 = inlined_call_operand.vmem [shape: bf16[32,2560], index: 1, kind: input, shape index: {}, may-alias: {1,2,3}]
  %s2 = inlined_call_operand.vmem [shape: bf16[32,2560], index: 2, kind: input, shape index: {}, may-alias: {1,2,3}]
  %s3 = inlined_call_operand.vmem [shape: bf16[32,2560], index: 3, kind: input, shape index: {}, may-alias: {1,2,3}]
  %s4 = inlined_call_operand.vmem [shape: bf16[32,288], index: 4, kind: input, shape index: {}]
  %s5 = inlined_call_operand.vmem [shape: f32[32,1], index: 5, kind: input, shape index: {}]
  %s6 = inlined_call_operand.vmem [shape: f32[32,2560], index: 6, kind: output, shape index: {}]
  %s7 = sld [smem:[#allocation0]]
  $region196: #{double_conv_forward.3} parent=0
    _
  %s9 = ssub.s32 1, %s7
  %s10 = scalar_select 0, %s9, %s7
  $region1: #{double_conv_forward.3} parent=0
    #allocation3 [shape = 'u8[16384]{0}', space=vmem, size = 0x4000, scoped, tag = 'input window, operand 1']
    #allocation4 [shape = 'u8[32768]{0}', space=vmem, size = 0x8000, scoped, tag = 'input window, operand 2']
    #allocation5 [shape = 'u8[16384]{0}', space=vmem, size = 0x4000, scoped, tag = 'input window, operand 3']
    #allocation6 [shape = 'u8[65536]{0}', space=vmem, size = 0x10000, scoped, tag = 'output window, operand 0']
    loop: start=0, step=1, limit=12
    $region2: #{double_conv_forward.3} parent=1 // loop_pre_header
      _
    $region3: #{double_conv_forward.3} parent=1 // loop_header
      %s12 = sphi 0, %s16
      %p13 = scmp.ge.s32.totalorder %s12, 12
      %s22 = sphi 0, %s24
      %s25 = sphi 0, %s22
      %s26 = sphi 0, %s25
      %s42 = sphi 0, %s26
      %s56 = sphi 0, %s58
      %s59 = sphi 0, %s56
      %s60 = sphi 0, %s59
      %s76 = sphi 0, %s60
      %s82 = sphi 0, %s84
      %s85 = sphi 0, %s82
      %s86 = sphi 0, %s85
      %s102 = sphi 0, %s86
      %s116 = sphi 0, %s118
      %s119 = sphi 0, %s116
      %s120 = sphi 0, %s119
      %s136 = sphi 0, %s120
      %s140 = sphi 0, %s140
      %s142 = sphi 0, %s140
      %s143 = sphi 0, %s142
      %s157 = sphi 0, %s143
      %s161 = sphi 0, %s161
      %s163 = sphi 0, %s161
      %s164 = sphi 0, %s163
      %s178 = sphi 0, %s164
      %s184 = sphi 0, %s186
      %s187 = sphi 0, %s184
      %s188 = sphi 0, %s187
      %s204 = sphi 0, %s188
    $region4: #{double_conv_forward.3} parent=1 // loop_header_branch
      %15 = sbr.rel (%p13) target = $region8
    $region5: #{double_conv_forward.3} parent=1 // loop_body
      %s17 = ssub.s32 %s12, 1
      %s18 = ssub.s32 %s12, 2
      %s19 = sadd.s32 %s12, 1
      %s20 = ssub.s32 %s12, %s19
      %p21 = scmp.eq.s32.totalorder %s20, 0
      %s23 = sadd.s32 %s22, 1
      %s24 = scalar_select %p21, %s22, %s23
      %p27 = pneg %p21
      %p28 = scmp.eq.s32.totalorder %s12, 9
      %p29 = por %p27, %p28
      %p30 = scmp.ne.s32.totalorder %s22, %s25
      %p31 = scmp.eq.s32.totalorder %s12, 0
      %p32 = por %p30, %p31
      %p33 = scmp.ne.s32.totalorder %s22, %s25
      %p34 = scmp.eq.s32.totalorder %s17, 9
      %p35 = por %p33, %p34
      %p36 = scmp.ne.s32.totalorder %s25, %s26
      %p37 = scmp.eq.s32.totalorder %s17, 0
      %p38 = por %p36, %p37
      %p39 = scmp.ne.s32.totalorder %s25, %s26
      %p40 = scmp.eq.s32.totalorder %s18, 9
      %p41 = por %p39, %p40
      %p43 = scmp.ne.s32.totalorder %s26, %s42
      %p44 = scmp.eq.s32.totalorder %s18, 0
      %p45 = por %p43, %p44
      %s46 = smul.u32 %s12, 2
      %s47 = ssub.s32 %s46, 1
      %p48 = scmp.gt.s32.totalorder %s47, 0
      %s49 = scalar_select %p48, %s47, 0
      %s50 = smul.u32 %s19, 2
      %s51 = ssub.s32 %s50, 1
      %p52 = scmp.gt.s32.totalorder %s51, 0
      %s53 = scalar_select %p52, %s51, 0
      %s54 = ssub.s32 %s49, %s53
      %p55 = scmp.eq.s32.totalorder %s54, 0
      %s57 = sadd.s32 %s56, 1
      %s58 = scalar_select %p55, %s56, %s57
      %p61 = pneg %p55
      %p62 = scmp.eq.s32.totalorder %s12, 9
      %p63 = por %p61, %p62
      %p64 = scmp.ne.s32.totalorder %s56, %s59
      %p65 = scmp.eq.s32.totalorder %s12, 0
      %p66 = por %p64, %p65
      %p67 = scmp.ne.s32.totalorder %s56, %s59
      %p68 = scmp.eq.s32.totalorder %s17, 9
      %p69 = por %p67, %p68
      %p70 = scmp.ne.s32.totalorder %s59, %s60
      %p71 = scmp.eq.s32.totalorder %s17, 0
      %p72 = por %p70, %p71
      %p73 = scmp.ne.s32.totalorder %s59, %s60
      %p74 = scmp.eq.s32.totalorder %s18, 9
      %p75 = por %p73, %p74
      %p77 = scmp.ne.s32.totalorder %s60, %s76
      %p78 = scmp.eq.s32.totalorder %s18, 0
      %p79 = por %p77, %p78
      %s80 = ssub.s32 %s12, %s19
      %p81 = scmp.eq.s32.totalorder %s80, 0
      %s83 = sadd.s32 %s82, 1
      %s84 = scalar_select %p81, %s82, %s83
      %p87 = pneg %p81
      %p88 = scmp.eq.s32.totalorder %s12, 9
      %p89 = por %p87, %p88
      %p90 = scmp.ne.s32.totalorder %s82, %s85
      %p91 = scmp.eq.s32.totalorder %s12, 0
      %p92 = por %p90, %p91
      %p93 = scmp.ne.s32.totalorder %s82, %s85
      %p94 = scmp.eq.s32.totalorder %s17, 9
      %p95 = por %p93, %p94
      %p96 = scmp.ne.s32.totalorder %s85, %s86
      %p97 = scmp.eq.s32.totalorder %s17, 0
      %p98 = por %p96, %p97
      %p99 = scmp.ne.s32.totalorder %s85, %s86
      %p100 = scmp.eq.s32.totalorder %s18, 9
      %p101 = por %p99, %p100
      %p103 = scmp.ne.s32.totalorder %s86, %s102
      %p104 = scmp.eq.s32.totalorder %s18, 0
      %p105 = por %p103, %p104
      %s106 = sadd.s32 %s12, 1
      %s107 = smul.u32 %s106, 2
      %p108 = scmp.lt.s32.totalorder %s107, 19
      %s109 = scalar_select %p108, %s107, 19
      %s110 = sadd.s32 %s19, 1
      %s111 = smul.u32 %s110, 2
      %p112 = scmp.lt.s32.totalorder %s111, 19
      %s113 = scalar_select %p112, %s111, 19
      %s114 = ssub.s32 %s109, %s113
      %p115 = scmp.eq.s32.totalorder %s114, 0
      %s117 = sadd.s32 %s116, 1
      %s118 = scalar_select %p115, %s116, %s117
      %p121 = pneg %p115
      %p122 = scmp.eq.s32.totalorder %s12, 9
      %p123 = por %p121, %p122
      %p124 = scmp.ne.s32.totalorder %s116, %s119
      %p125 = scmp.eq.s32.totalorder %s12, 0
      %p126 = por %p124, %p125
      %p127 = scmp.ne.s32.totalorder %s116, %s119
      %p128 = scmp.eq.s32.totalorder %s17, 9
      %p129 = por %p127, %p128
      %p130 = scmp.ne.s32.totalorder %s119, %s120
      %p131 = scmp.eq.s32.totalorder %s17, 0
      %p132 = por %p130, %p131
      %p133 = scmp.ne.s32.totalorder %s119, %s120
      %p134 = scmp.eq.s32.totalorder %s18, 9
      %p135 = por %p133, %p134
      %p137 = scmp.ne.s32.totalorder %s120, %s136
      %p138 = scmp.eq.s32.totalorder %s18, 0
      %p139 = por %p137, %p138
      %s141 = sadd.s32 %s140, 1
      %p144 = scmp.eq.s32.totalorder %s12, 9
      %p145 = scmp.ne.s32.totalorder %s140, %s142
      %p146 = scmp.eq.s32.totalorder %s12, 0
      %p147 = por %p145, %p146
      %p148 = scmp.ne.s32.totalorder %s140, %s142
      %p149 = scmp.eq.s32.totalorder %s17, 9
      %p150 = por %p148, %p149
      %p151 = scmp.ne.s32.totalorder %s142, %s143
      %p152 = scmp.eq.s32.totalorder %s17, 0
      %p153 = por %p151, %p152
      %p154 = scmp.ne.s32.totalorder %s142, %s143
      %p155 = scmp.eq.s32.totalorder %s18, 9
      %p156 = por %p154, %p155
      %p158 = scmp.ne.s32.totalorder %s143, %s157
      %p159 = scmp.eq.s32.totalorder %s18, 0
      %p160 = por %p158, %p159
      %s162 = sadd.s32 %s161, 1
      %p165 = scmp.eq.s32.totalorder %s12, 9
      %p166 = scmp.ne.s32.totalorder %s161, %s163
      %p167 = scmp.eq.s32.totalorder %s12, 0
      %p168 = por %p166, %p167
      %p169 = scmp.ne.s32.totalorder %s161, %s163
      %p170 = scmp.eq.s32.totalorder %s17, 9
      %p171 = por %p169, %p170
      %p172 = scmp.ne.s32.totalorder %s163, %s164
      %p173 = scmp.eq.s32.totalorder %s17, 0
      %p174 = por %p172, %p173
      %p175 = scmp.ne.s32.totalorder %s163, %s164
      %p176 = scmp.eq.s32.totalorder %s18, 9
      %p177 = por %p175, %p176
      %p179 = scmp.ne.s32.totalorder %s164, %s178
      %p180 = scmp.eq.s32.totalorder %s18, 0
      %p181 = por %p179, %p180
      %s182 = ssub.s32 %s12, %s19
      %p183 = scmp.eq.s32.totalorder %s182, 0
      %s185 = sadd.s32 %s184, 1
      %s186 = scalar_select %p183, %s184, %s185
      %p189 = pneg %p183
      %p190 = scmp.eq.s32.totalorder %s12, 9
      %p191 = por %p189, %p190
      %p192 = scmp.ne.s32.totalorder %s184, %s187
      %p193 = scmp.eq.s32.totalorder %s12, 0
      %p194 = por %p192, %p193
      %p195 = scmp.ne.s32.totalorder %s184, %s187
      %p196 = scmp.eq.s32.totalorder %s17, 9
      %p197 = por %p195, %p196
      %p198 = scmp.ne.s32.totalorder %s187, %s188
      %p199 = scmp.eq.s32.totalorder %s17, 0
      %p200 = por %p198, %p199
      %p201 = scmp.ne.s32.totalorder %s187, %s188
      %p202 = scmp.eq.s32.totalorder %s18, 9
      %p203 = por %p201, %p202
      %p205 = scmp.ne.s32.totalorder %s188, %s204
      %p206 = scmp.eq.s32.totalorder %s18, 0
      %p207 = por %p205, %p206
      %p208 = scmp.le.s32.totalorder 1, %s12
      %p209 = scmp.lt.s32.totalorder %s12, 11
      %p210 = pnand %p208, %p209
      %p211 = pneg %p210
      // Predicated region
      $region9: #{double_conv_forward.3} parent=5 // pred_check
        _
      $region10: #{double_conv_forward.3} parent=5 // pred_check_branch
        %213 = sbr.rel (%p210) target = $region12
      $region11: #{double_conv_forward.3} parent=5 // pred_region
        %s214 = ssub.s32 %s12, 1
        // Predicated region
        $region13: #{double_conv_forward.3} parent=11 // pred_check
          %p215 = pneg %p153
        $region14: #{double_conv_forward.3} parent=11 // pred_check_branch
          %217 = sbr.rel (%p215) target = $region16
        $region15: #{double_conv_forward.3} parent=11 // pred_region
          _
        $region16: #{double_conv_forward.3} parent=11 // pred_fallthru
          _
        // Predicated region
        $region17: #{double_conv_forward.3} parent=11 // pred_check
          %p218 = pneg %p174
        $region18: #{double_conv_forward.3} parent=11 // pred_check_branch
          %220 = sbr.rel (%p218) target = $region20
        $region19: #{double_conv_forward.3} parent=11 // pred_region
          _
        $region20: #{double_conv_forward.3} parent=11 // pred_fallthru
          _
      $region12: #{double_conv_forward.3} parent=5 // pred_fallthru
        _
      %p221 = scmp.lt.s32.totalorder %s12, 10
      // Predicated region
      $region21: #{double_conv_forward.3} parent=5 // pred_check
        %p222 = pneg %p221
      $region22: #{double_conv_forward.3} parent=5 // pred_check_branch
        %224 = sbr.rel (%p222) target = $region24
      $region23: #{double_conv_forward.3} parent=5 // pred_region
        // Predicated region
        $region25: #{double_conv_forward.3} parent=23 // pred_check
          %p225 = pneg %p32
        $region26: #{double_conv_forward.3} parent=23 // pred_check_branch
          %227 = sbr.rel (%p225) target = $region28
        $region27: #{double_conv_forward.3} parent=23 // pred_region
          %s228 = smul.u32 2, %s12
          %p229 = scmp.lt.s32.totalorder %s228, 19
          %s230 = scalar_select %p229, %s228, 19
          %s231 = scalar_lea.vmem %s0, %s230
          %s232 = smul.u32 2, %s12
        $region28: #{double_conv_forward.3} parent=23 // pred_fallthru
          _
        // Predicated region
        $region29: #{double_conv_forward.3} parent=23 // pred_check
          %p233 = pneg %p66
        $region30: #{double_conv_forward.3} parent=23 // pred_check_branch
          %235 = sbr.rel (%p233) target = $region32
        $region31: #{double_conv_forward.3} parent=23 // pred_region
          %s236 = sand.u32 %s56, 1
          %s237 = sand.u32 %s56, 1
          %s238 = smul.addr %s237, 16
          %s239 = scalar_lea.vmem [#allocation3], %s238
          %s240 = smul.u32 %s12, 2
          %s241 = ssub.s32 %s240, 1
          %p242 = scmp.gt.s32.totalorder %s241, 0
          %s243 = scalar_select %p242, %s241, 0
          %s244 = smul.addr %s243, 4
          %s245 = scalar_lea.vmem %s1, %s244
          // Predicated region
          $region33: #{double_conv_forward.3} parent=31 // pred_check
            _
          $region34: #{double_conv_forward.3} parent=31 // pred_check_branch
            %247 = sbr.rel (0) target = $region36
          $region35: #{double_conv_forward.3} parent=31 // pred_region
            // Predicated region
            $region37: #{double_conv_forward.3} parent=35 // pred_check
              _
            $region38: #{double_conv_forward.3} parent=35 // pred_check_branch
              %249 = sbr.rel target = $region40
            $region39: #{double_conv_forward.3} parent=35 // pred_region
              // Predicated region
              $region52: #{double_conv_forward.3} parent=39 // pred_check
                _
              $region53: #{double_conv_forward.3} parent=39 // pred_check_branch
                %270 = sbr.rel (0) target = $region55
              $region54: #{double_conv_forward.3} parent=39 // pred_region
                loop: start=0, step=1, limit=1
                $region56: #{double_conv_forward.3} parent=54 // loop_pre_header
                  _
                $region57: #{double_conv_forward.3} parent=54 // loop_header
                  %s272 = sphi 0, %s276
                  %p273 = scmp.ge.s32.totalorder %s272, 1
                  %s277 = sphi %s245, %s245
                  %s278 = sphi %s239, %s239
                $region58: #{double_conv_forward.3} parent=54 // loop_header_branch
                  %275 = sbr.rel (%p273) target = $region62
                $region59: #{double_conv_forward.3} parent=54 // loop_body
                  _
                $region60: #{double_conv_forward.3} parent=54 // loop_footer
                  %s276 = sadd.s32 1, %s272
                $region61: #{double_conv_forward.3} parent=54 // loop_footer_branch
                  %271 = sbr.rel target = $region57
                $region62: #{double_conv_forward.3} parent=54 // loop_exit
                  _
                loop: start=0, step=1, limit=1
                $region63: #{double_conv_forward.3} parent=54 // loop_pre_header
                  _
                $region64: #{double_conv_forward.3} parent=54 // loop_header
                  %s281 = sphi 0, %s285
                  %p282 = scmp.ge.s32.totalorder %s281, 1
                  %s286 = sphi %s245, %s245
                  %s287 = sphi %s239, %s239
                $region65: #{double_conv_forward.3} parent=54 // loop_header_branch
                  %284 = sbr.rel (%p282) target = $region69
                $region66: #{double_conv_forward.3} parent=54 // loop_body
                  %v288 = vld [vmem:[%s286] sm:$0xf]
                  %289 = vst [vmem:[%s287] sm:$0xf] %v288
                  %v290 = vld [vmem:[%s286 + $0x50] sm:$0xf]
                  %291 = vst [vmem:[%s287 + $0x4] sm:$0xf] %v290
                  %v292 = vld [vmem:[%s286 + $0xa0] sm:$0xf]
                  %293 = vst [vmem:[%s287 + $0x8] sm:$0xf] %v292
                  %v294 = vld [vmem:[%s286 + $0xf0] sm:$0xf]
                  %295 = vst [vmem:[%s287 + $0xc] sm:$0xf] %v294
                $region67: #{double_conv_forward.3} parent=54 // loop_footer
                  %s285 = sadd.s32 1, %s281
                $region68: #{double_conv_forward.3} parent=54 // loop_footer_branch
                  %280 = sbr.rel target = $region64
                $region69: #{double_conv_forward.3} parent=54 // loop_exit
                  _
              $region55: #{double_conv_forward.3} parent=39 // pred_fallthru
                _
            $region40: #{double_conv_forward.3} parent=35 // pred_fallthru
              _
            // Predicated region
            $region41: #{double_conv_forward.3} parent=35 // pred_check
              _
            $region42: #{double_conv_forward.3} parent=35 // pred_check_branch
              %251 = sbr.rel (0) target = $region44
            $region43: #{double_conv_forward.3} parent=35 // pred_region
              loop: start=0, step=1, limit=1
              $region45: #{double_conv_forward.3} parent=43 // loop_pre_header
                _
              $region46: #{double_conv_forward.3} parent=43 // loop_header
                %s254 = sphi 0, %s258
                %p255 = scmp.ge.s32.totalorder %s254, 1
                %s259 = sphi %s245, %s245
                %s260 = sphi %s239, %s239
              $region47: #{double_conv_forward.3} parent=43 // loop_header_branch
                %257 = sbr.rel (%p255) target = $region51
              $region48: #{double_conv_forward.3} parent=43 // loop_body
                %v261 = vld [vmem:[%s259] sm:$0xf]
                %262 = vst [vmem:[%s260] sm:$0xf] %v261
                %v263 = vld [vmem:[%s259 + $0x50] sm:$0xf]
                %264 = vst [vmem:[%s260 + $0x4] sm:$0xf] %v263
                %v265 = vld [vmem:[%s259 + $0xa0] sm:$0xf]
                %266 = vst [vmem:[%s260 + $0x8] sm:$0xf] %v265
                %v267 = vld [vmem:[%s259 + $0xf0] sm:$0xf]
                %268 = vst [vmem:[%s260 + $0xc] sm:$0xf] %v267
              $region49: #{double_conv_forward.3} parent=43 // loop_footer
                %s258 = sadd.s32 1, %s254
              $region50: #{double_conv_forward.3} parent=43 // loop_footer_branch
                %253 = sbr.rel target = $region46
              $region51: #{double_conv_forward.3} parent=43 // loop_exit
                _
            $region44: #{double_conv_forward.3} parent=35 // pred_fallthru
              _
          $region36: #{double_conv_forward.3} parent=31 // pred_fallthru
            _
          %296 = vnop
        $region32: #{double_conv_forward.3} parent=23 // pred_fallthru
          _
        // Predicated region
        $region70: #{double_conv_forward.3} parent=23 // pred_check
          %p297 = pneg %p92
        $region71: #{double_conv_forward.3} parent=23 // pred_check_branch
          %299 = sbr.rel (%p297) target = $region73
        $region72: #{double_conv_forward.3} parent=23 // pred_region
          %s300 = sand.u32 %s82, 1
          %s301 = sand.u32 %s82, 1
          %s302 = smul.addr %s301, 32
          %s303 = scalar_lea.vmem [#allocation4], %s302
          %s304 = smul.u32 2, %s12
          %s305 = smul.addr %s304, 4
          %s306 = scalar_lea.vmem %s2, %s305
          // Predicated region
          $region74: #{double_conv_forward.3} parent=72 // pred_check
            _
          $region75: #{double_conv_forward.3} parent=72 // pred_check_branch
            %308 = sbr.rel (0) target = $region77
          $region76: #{double_conv_forward.3} parent=72 // pred_region
            // Predicated region
            $region78: #{double_conv_forward.3} parent=76 // pred_check
              _
            $region79: #{double_conv_forward.3} parent=76 // pred_check_branch
              %310 = sbr.rel (0) target = $region81
            $region80: #{double_conv_forward.3} parent=76 // pred_region
              // Predicated region
              $region93: #{double_conv_forward.3} parent=80 // pred_check
                _
              $region94: #{double_conv_forward.3} parent=80 // pred_check_branch
                %331 = sbr.rel (0) target = $region96
              $region95: #{double_conv_forward.3} parent=80 // pred_region
                loop: start=0, step=1, limit=1
                $region97: #{double_conv_forward.3} parent=95 // loop_pre_header
                  _
                $region98: #{double_conv_forward.3} parent=95 // loop_header
                  %s333 = sphi 0, %s337
                  %p334 = scmp.ge.s32.totalorder %s333, 1
                  %s338 = sphi %s306, %s306
                  %s339 = sphi %s303, %s303
                $region99: #{double_conv_forward.3} parent=95 // loop_header_branch
                  %336 = sbr.rel (%p334) target = $region103
                $region100: #{double_conv_forward.3} parent=95 // loop_body
                  %v340 = vld [vmem:[%s338] sm:$0xff]
                  %341 = vst [vmem:[%s339] sm:$0xff] %v340
                  %v342 = vld [vmem:[%s338 + $0x50] sm:$0xff]
                  %343 = vst [vmem:[%s339 + $0x8] sm:$0xff] %v342
                  %v344 = vld [vmem:[%s338 + $0xa0] sm:$0xff]
                  %345 = vst [vmem:[%s339 + $0x10] sm:$0xff] %v344
                  %v346 = vld [vmem:[%s338 + $0xf0] sm:$0xff]
                  %347 = vst [vmem:[%s339 + $0x18] sm:$0xff] %v346
                $region101: #{double_conv_forward.3} parent=95 // loop_footer
                  %s337 = sadd.s32 1, %s333
                $region102: #{double_conv_forward.3} parent=95 // loop_footer_branch
                  %332 = sbr.rel target = $region98
                $region103: #{double_conv_forward.3} parent=95 // loop_exit
                  _
              $region96: #{double_conv_forward.3} parent=80 // pred_fallthru
                _
              // Predicated region
              $region104: #{double_conv_forward.3} parent=80 // pred_check
                _
              $region105: #{double_conv_forward.3} parent=80 // pred_check_branch
                %349 = sbr.rel target = $region107
              $region106: #{double_conv_forward.3} parent=80 // pred_region
                _
              $region107: #{double_conv_forward.3} parent=80 // pred_fallthru
                _
            $region81: #{double_conv_forward.3} parent=76 // pred_fallthru
              _
            // Predicated region
            $region82: #{double_conv_forward.3} parent=76 // pred_check
              _
            $region83: #{double_conv_forward.3} parent=76 // pred_check_branch
              %312 = sbr.rel target = $region85
            $region84: #{double_conv_forward.3} parent=76 // pred_region
              loop: start=0, step=1, limit=1
              $region86: #{double_conv_forward.3} parent=84 // loop_pre_header
                _
              $region87: #{double_conv_forward.3} parent=84 // loop_header
                %s315 = sphi 0, %s319
                %p316 = scmp.ge.s32.totalorder %s315, 1
                %s320 = sphi %s306, %s306
                %s321 = sphi %s303, %s303
              $region88: #{double_conv_forward.3} parent=84 // loop_header_branch
                %318 = sbr.rel (%p316) target = $region92
              $region89: #{double_conv_forward.3} parent=84 // loop_body
                %v322 = vld [vmem:[%s320] sm:$0xff]
                %323 = vst [vmem:[%s321] sm:$0xff] %v322
                %v324 = vld [vmem:[%s320 + $0x50] sm:$0xff]
                %325 = vst [vmem:[%s321 + $0x8] sm:$0xff] %v324
                %v326 = vld [vmem:[%s320 + $0xa0] sm:$0xff]
                %327 = vst [vmem:[%s321 + $0x10] sm:$0xff] %v326
                %v328 = vld [vmem:[%s320 + $0xf0] sm:$0xff]
                %329 = vst [vmem:[%s321 + $0x18] sm:$0xff] %v328
              $region90: #{double_conv_forward.3} parent=84 // loop_footer
                %s319 = sadd.s32 1, %s315
              $region91: #{double_conv_forward.3} parent=84 // loop_footer_branch
                %314 = sbr.rel target = $region87
              $region92: #{double_conv_forward.3} parent=84 // loop_exit
                _
            $region85: #{double_conv_forward.3} parent=76 // pred_fallthru
              _
          $region77: #{double_conv_forward.3} parent=72 // pred_fallthru
            _
          %350 = vnop
        $region73: #{double_conv_forward.3} parent=23 // pred_fallthru
          _
        // Predicated region
        $region108: #{double_conv_forward.3} parent=23 // pred_check
          %p351 = pneg %p126
        $region109: #{double_conv_forward.3} parent=23 // pred_check_branch
          %353 = sbr.rel (%p351) target = $region111
        $region110: #{double_conv_forward.3} parent=23 // pred_region
          %s354 = sand.u32 %s116, 1
          %s355 = sand.u32 %s116, 1
          %s356 = smul.addr %s355, 16
          %s357 = scalar_lea.vmem [#allocation5], %s356
          %s358 = sadd.s32 %s12, 1
          %s359 = smul.u32 %s358, 2
          %p360 = scmp.lt.s32.totalorder %s359, 19
          %s361 = scalar_select %p360, %s359, 19
          %s362 = smul.addr %s361, 4
          %s363 = scalar_lea.vmem %s3, %s362
          // Predicated region
          $region112: #{double_conv_forward.3} parent=110 // pred_check
            _
          $region113: #{double_conv_forward.3} parent=110 // pred_check_branch
            %365 = sbr.rel (0) target = $region115
          $region114: #{double_conv_forward.3} parent=110 // pred_region
            // Predicated region
            $region116: #{double_conv_forward.3} parent=114 // pred_check
              _
            $region117: #{double_conv_forward.3} parent=114 // pred_check_branch
              %367 = sbr.rel target = $region119
            $region118: #{double_conv_forward.3} parent=114 // pred_region
              // Predicated region
              $region131: #{double_conv_forward.3} parent=118 // pred_check
                _
              $region132: #{double_conv_forward.3} parent=118 // pred_check_branch
                %388 = sbr.rel (0) target = $region134
              $region133: #{double_conv_forward.3} parent=118 // pred_region
                loop: start=0, step=1, limit=1
                $region135: #{double_conv_forward.3} parent=133 // loop_pre_header
                  _
                $region136: #{double_conv_forward.3} parent=133 // loop_header
                  %s390 = sphi 0, %s394
                  %p391 = scmp.ge.s32.totalorder %s390, 1
                  %s395 = sphi %s363, %s363
                  %s396 = sphi %s357, %s357
                $region137: #{double_conv_forward.3} parent=133 // loop_header_branch
                  %393 = sbr.rel (%p391) target = $region141
                $region138: #{double_conv_forward.3} parent=133 // loop_body
                  _
                $region139: #{double_conv_forward.3} parent=133 // loop_footer
                  %s394 = sadd.s32 1, %s390
                $region140: #{double_conv_forward.3} parent=133 // loop_footer_branch
                  %389 = sbr.rel target = $region136
                $region141: #{double_conv_forward.3} parent=133 // loop_exit
                  _
                loop: start=0, step=1, limit=1
                $region142: #{double_conv_forward.3} parent=133 // loop_pre_header
                  _
                $region143: #{double_conv_forward.3} parent=133 // loop_header
                  %s399 = sphi 0, %s403
                  %p400 = scmp.ge.s32.totalorder %s399, 1
                  %s404 = sphi %s363, %s363
                  %s405 = sphi %s357, %s357
                $region144: #{double_conv_forward.3} parent=133 // loop_header_branch
                  %402 = sbr.rel (%p400) target = $region148
                $region145: #{double_conv_forward.3} parent=133 // loop_body
                  %v406 = vld [vmem:[%s404] sm:$0xf]
                  %407 = vst [vmem:[%s405] sm:$0xf] %v406
                  %v408 = vld [vmem:[%s404 + $0x50] sm:$0xf]
                  %409 = vst [vmem:[%s405 + $0x4] sm:$0xf] %v408
                  %v410 = vld [vmem:[%s404 + $0xa0] sm:$0xf]
                  %411 = vst [vmem:[%s405 + $0x8] sm:$0xf] %v410
                  %v412 = vld [vmem:[%s404 + $0xf0] sm:$0xf]
                  %413 = vst [vmem:[%s405 + $0xc] sm:$0xf] %v412
                $region146: #{double_conv_forward.3} parent=133 // loop_footer
                  %s403 = sadd.s32 1, %s399
                $region147: #{double_conv_forward.3} parent=133 // loop_footer_branch
                  %398 = sbr.rel target = $region143
                $region148: #{double_conv_forward.3} parent=133 // loop_exit
                  _
              $region134: #{double_conv_forward.3} parent=118 // pred_fallthru
                _
            $region119: #{double_conv_forward.3} parent=114 // pred_fallthru
              _
            // Predicated region
            $region120: #{double_conv_forward.3} parent=114 // pred_check
              _
            $region121: #{double_conv_forward.3} parent=114 // pred_check_branch
              %369 = sbr.rel (0) target = $region123
            $region122: #{double_conv_forward.3} parent=114 // pred_region
              loop: start=0, step=1, limit=1
              $region124: #{double_conv_forward.3} parent=122 // loop_pre_header
                _
              $region125: #{double_conv_forward.3} parent=122 // loop_header
                %s372 = sphi 0, %s376
                %p373 = scmp.ge.s32.totalorder %s372, 1
                %s377 = sphi %s363, %s363
                %s378 = sphi %s357, %s357
              $region126: #{double_conv_forward.3} parent=122 // loop_header_branch
                %375 = sbr.rel (%p373) target = $region130
              $region127: #{double_conv_forward.3} parent=122 // loop_body
                %v379 = vld [vmem:[%s377] sm:$0xf]
                %380 = vst [vmem:[%s378] sm:$0xf] %v379
                %v381 = vld [vmem:[%s377 + $0x50] sm:$0xf]
                %382 = vst [vmem:[%s378 + $0x4] sm:$0xf] %v381
                %v383 = vld [vmem:[%s377 + $0xa0] sm:$0xf]
                %384 = vst [vmem:[%s378 + $0x8] sm:$0xf] %v383
                %v385 = vld [vmem:[%s377 + $0xf0] sm:$0xf]
                %386 = vst [vmem:[%s378 + $0xc] sm:$0xf] %v385
              $region128: #{double_conv_forward.3} parent=122 // loop_footer
                %s376 = sadd.s32 1, %s372
              $region129: #{double_conv_forward.3} parent=122 // loop_footer_branch
                %371 = sbr.rel target = $region125
              $region130: #{double_conv_forward.3} parent=122 // loop_exit
                _
            $region123: #{double_conv_forward.3} parent=114 // pred_fallthru
              _
          $region115: #{double_conv_forward.3} parent=110 // pred_fallthru
            _
          %414 = vnop
        $region111: #{double_conv_forward.3} parent=23 // pred_fallthru
          _
      $region24: #{double_conv_forward.3} parent=5 // pred_fallthru
        _
      %p415 = scmp.le.s32.totalorder 1, %s12
      %p416 = scmp.lt.s32.totalorder %s12, 11
      %p417 = pnand %p415, %p416
      %p418 = pneg %p417
      // Predicated region
      $region149: #{double_conv_forward.3} parent=5 // pred_check
        _
      $region150: #{double_conv_forward.3} parent=5 // pred_check_branch
        %420 = sbr.rel (%p417) target = $region152
      $region151: #{double_conv_forward.3} parent=5 // pred_region
        %s421 = ssub.s32 %s12, 1
        %s422 = sand.u32 %s59, 1
        %s423 = sand.u32 %s59, 1
        %s424 = smul.addr %s423, 16
        %s425 = scalar_lea.vmem [#allocation3], %s424
        // Predicated region
        $region153: #{double_conv_forward.3} parent=151 // pred_check
          %p426 = pneg %p72
        $region154: #{double_conv_forward.3} parent=151 // pred_check_branch
          %428 = sbr.rel (%p426) target = $region156
        $region155: #{double_conv_forward.3} parent=151 // pred_region
          _
        $region156: #{double_conv_forward.3} parent=151 // pred_fallthru
          _
        %s429 = sand.u32 %s85, 1
        %s430 = sand.u32 %s85, 1
        %s431 = smul.addr %s430, 32
        %s432 = scalar_lea.vmem [#allocation4], %s431
        // Predicated region
        $region157: #{double_conv_forward.3} parent=151 // pred_check
          %p433 = pneg %p98
        $region158: #{double_conv_forward.3} parent=151 // pred_check_branch
          %435 = sbr.rel (%p433) target = $region160
        $region159: #{double_conv_forward.3} parent=151 // pred_region
          _
        $region160: #{double_conv_forward.3} parent=151 // pred_fallthru
          _
        %s436 = sand.u32 %s119, 1
        %s437 = sand.u32 %s119, 1
        %s438 = smul.addr %s437, 16
        %s439 = scalar_lea.vmem [#allocation5], %s438
        // Predicated region
        $region161: #{double_conv_forward.3} parent=151 // pred_check
          %p440 = pneg %p132
        $region162: #{double_conv_forward.3} parent=151 // pred_check_branch
          %442 = sbr.rel (%p440) target = $region164
        $region163: #{double_conv_forward.3} parent=151 // pred_region
          _
        $region164: #{double_conv_forward.3} parent=151 // pred_fallthru
          _
        %s443 = smul.u32 2, %s17
        %p444 = scmp.lt.s32.totalorder %s443, 19
        %s445 = scalar_select %p444, %s443, 19
        %s446 = scalar_lea.vmem %s0, %s445
        %p447 = pneg %p38
        %p448 = pneg %p35
        %s449 = sand.u32 %s59, 1
        %s450 = sand.u32 %s59, 1
        %s451 = smul.addr %s450, 16
        %s452 = scalar_lea.vmem [#allocation3], %s451
        %p453 = pneg %p72
        %p454 = pneg %p69
        %s455 = sand.u32 %s85, 1
        %s456 = sand.u32 %s85, 1
        %s457 = smul.addr %s456, 32
        %s458 = scalar_lea.vmem [#allocation4], %s457
        %p459 = pneg %p98
        %p460 = pneg %p95
        %s461 = sand.u32 %s119, 1
        %s462 = sand.u32 %s119, 1
        %s463 = smul.addr %s462, 16
        %s464 = scalar_lea.vmem [#allocation5], %s463
        %p465 = pneg %p132
        %p466 = pneg %p129
        %p467 = pneg %p153
        %p468 = pneg %p150
        %p469 = pneg %p174
        %p470 = pneg %p171
        %p471 = pneg %p200
        %p472 = pneg %p197
        %s473 = sand.u32 %s187, 1
        %s474 = sand.u32 %s187, 1
        %s475 = smul.addr %s474, 64
        %s476 = scalar_lea.vmem [#allocation6], %s475
        %s477 = smul.u32 2, %s17
        %p478 = scmp.lt.s32.totalorder %s477, 19
        %s479 = scalar_select %p478, %s477, 19
        %s480 = scalar_lea.vmem %s0, %s479
        %s481 = smul.u32 2, %s17
        %s482 = smul.u32 %s17, 2
        %s483 = ssub.s32 %s482, 1
        %p484 = scmp.gt.s32.totalorder %s483, 0
        %s485 = scalar_select %p484, %s483, 0
        %s486 = smul.u32 2, %s17
        %s487 = sadd.s32 %s17, 1
        %s488 = smul.u32 %s487, 2
        %p489 = scmp.lt.s32.totalorder %s488, 19
        %s490 = scalar_select %p489, %s488, 19
        %s491 = smul.u32 2, %s17
        %v493 = vld [vmem:[%s425] sm:$0xf]
        %v494 = vld [vmem:[%s425 + $0x4] sm:$0xf]
        %v495 = vld [vmem:[%s425 + $0x8] sm:$0xf]
        %v496 = vld [vmem:[%s425 + $0xc] sm:$0xf]
        %v497 = vld [vmem:[%s432] sm:$0xff]
        %v498 = vld [vmem:[%s432 + $0x8] sm:$0xff]
        %v499 = vld [vmem:[%s432 + $0x10] sm:$0xff]
        %v500 = vld [vmem:[%s432 + $0x18] sm:$0xff]
        %v501 = vld [vmem:[%s439] sm:$0xf]
        %v502 = vld [vmem:[%s439 + $0x4] sm:$0xf]
        %v503 = vld [vmem:[%s439 + $0x8] sm:$0xf]
        %v504 = vld [vmem:[%s439 + $0xc] sm:$0xf]
        %v509 = vunpack.c.l.b16 %v493
        %v510 = vunpack.c.l.b16 %v494
        %v511 = vunpack.c.l.b16 %v495
        %v512 = vunpack.c.l.b16 %v496
        %v513 = vpack.c.b16 %v510, %v509
        %v514 = vpack.c.b16 %v512, %v511
        %515 = vrot.lane.b32.xlu0 %v513, 35
        %v516 = vpop.permute.xlu0 %515
        %517 = vrot.lane.b32.xlu0 %v514, 35
        %v518 = vpop.permute.xlu0 %517
        %v523 = vunpack.c.l.b16 %v497
        %v524 = vunpack.c.h.b16 %v497
        %v525 = vunpack.c.l.b16 %v498
        %v526 = vunpack.c.h.b16 %v498
        %v527 = vunpack.c.l.b16 %v499
        %v528 = vunpack.c.h.b16 %v499
        %v529 = vunpack.c.l.b16 %v500
        %v530 = vunpack.c.h.b16 %v500
        %v531 = vpack.c.b16 %v525, %v523
        %v532 = vpack.c.b16 %v526, %v524
        %v533 = vpack.c.b16 %v529, %v527
        %v534 = vpack.c.b16 %v530, %v528
        %535 = vrot.lane.b32.xlu0 %v531, 35
        %v536 = vpop.permute.xlu0 %535
        %537 = vrot.lane.b32.xlu0 %v532, 35
        %v538 = vpop.permute.xlu0 %537
        %539 = vrot.lane.b32.xlu0 %v533, 35
        %v540 = vpop.permute.xlu0 %539
        %541 = vrot.lane.b32.xlu0 %v534, 35
        %v542 = vpop.permute.xlu0 %541
        %vm543 = vcmask 285696
        %v544 = vsel %vm543, %v536, %v538
        %v545 = vsel %vm543, %v540, %v542
        %vm548 = vcmask 285696
        %v551 = vsel %vm548, %v516, %v536
        %v555 = vsel %vm548, %v518, %v540
        %557 = vst [vmem:[#allocation2] sm:$0xff] %v551
        %558 = vst [vmem:[#allocation2 + $0x8] sm:$0xff] %v544
        %559 = vst [vmem:[#allocation2 + $0x10] sm:$0xff] %v555
        %560 = vst [vmem:[#allocation2 + $0x18] sm:$0xff] %v545
        %561 = vrot.lane.b32.xlu0 %v513, 34
        %v562 = vpop.permute.xlu0 %561
        %563 = vrot.lane.b32.xlu0 %v514, 34
        %v564 = vpop.permute.xlu0 %563
        %565 = vrot.lane.b32.xlu0 %v531, 34
        %v566 = vpop.permute.xlu0 %565
        %567 = vrot.lane.b32.xlu0 %v532, 34
        %v568 = vpop.permute.xlu0 %567
        %569 = vrot.lane.b32.xlu0 %v533, 34
        %v570 = vpop.permute.xlu0 %569
        %571 = vrot.lane.b32.xlu0 %v534, 34
        %v572 = vpop.permute.xlu0 %571
        %vm573 = vcmask 277504
        %v574 = vsel %vm573, %v566, %v568
        %v575 = vsel %vm573, %v570, %v572
        %vm578 = vcmask 277504
        %v581 = vsel %vm578, %v562, %v566
        %v585 = vsel %vm578, %v564, %v570
        %587 = vst [vmem:[#allocation2 + $0x20] sm:$0xff] %v581
        %588 = vst [vmem:[#allocation2 + $0x28] sm:$0xff] %v574
        %589 = vst [vmem:[#allocation2 + $0x30] sm:$0xff] %v585
        %590 = vst [vmem:[#allocation2 + $0x38] sm:$0xff] %v575
        %591 = vrot.lane.b32.xlu0 %v513, 33
        %v592 = vpop.permute.xlu0 %591
        %593 = vrot.lane.b32.xlu0 %v514, 33
        %v594 = vpop.permute.xlu0 %593
        %595 = vrot.lane.b32.xlu0 %v531, 33
        %v596 = vpop.permute.xlu0 %595
        %597 = vrot.lane.b32.xlu0 %v532, 33
        %v598 = vpop.permute.xlu0 %597
        %599 = vrot.lane.b32.xlu0 %v533, 33
        %v600 = vpop.permute.xlu0 %599
        %601 = vrot.lane.b32.xlu0 %v534, 33
        %v602 = vpop.permute.xlu0 %601
        %vm603 = vcmask 269312
        %v604 = vsel %vm603, %v596, %v598
        %v605 = vsel %vm603, %v600, %v602
        %vm608 = vcmask 269312
        %v611 = vsel %vm608, %v592, %v596
        %v615 = vsel %vm608, %v594, %v600
        %617 = vst [vmem:[#allocation2 + $0x40] sm:$0xff] %v611
        %618 = vst [vmem:[#allocation2 + $0x48] sm:$0xff] %v604
        %619 = vst [vmem:[#allocation2 + $0x50] sm:$0xff] %v615
        %620 = vst [vmem:[#allocation2 + $0x58] sm:$0xff] %v605
        %621 = vrot.lane.b32.xlu0 %v513, 1
        %v622 = vpop.permute.xlu0 %621
        %623 = vrot.lane.b32.xlu0 %v514, 1
        %v624 = vpop.permute.xlu0 %623
        %625 = vrot.lane.b32.xlu0 %v531, 1
        %v626 = vpop.permute.xlu0 %625
        %627 = vrot.lane.b32.xlu0 %v532, 1
        %v628 = vpop.permute.xlu0 %627
        %629 = vrot.lane.b32.xlu0 %v533, 1
        %v630 = vpop.permute.xlu0 %629
        %631 = vrot.lane.b32.xlu0 %v534, 1
        %v632 = vpop.permute.xlu0 %631
        %vm633 = vcmask 7168
        %v634 = vsel %vm633, %v626, %v628
        %v635 = vsel %vm633, %v630, %v632
        %vm638 = vcmask 7168
        %v641 = vsel %vm638, %v622, %v626
        %v645 = vsel %vm638, %v624, %v630
        %647 = vst [vmem:[#allocation2 + $0x60] sm:$0xff] %v641
        %648 = vst [vmem:[#allocation2 + $0x68] sm:$0xff] %v634
        %649 = vst [vmem:[#allocation2 + $0x70] sm:$0xff] %v645
        %650 = vst [vmem:[#allocation2 + $0x78] sm:$0xff] %v635
        %655 = vst [vmem:[#allocation2 + $0x80] sm:$0xff] %v531
        %656 = vst [vmem:[#allocation2 + $0x88] sm:$0xff] %v532
        %657 = vst [vmem:[#allocation2 + $0x90] sm:$0xff] %v533
        %658 = vst [vmem:[#allocation2 + $0x98] sm:$0xff] %v534
        %659 = vrot.lane.b32.xlu0 %v531, 127
        %v660 = vpop.permute.xlu0 %659
        %661 = vrot.lane.b32.xlu0 %v532, 127
        %v662 = vpop.permute.xlu0 %661
        %663 = vrot.lane.b32.xlu0 %v533, 127
        %v664 = vpop.permute.xlu0 %663
        %665 = vrot.lane.b32.xlu0 %v534, 127
        %v666 = vpop.permute.xlu0 %665
        %vm667 = vcmask 1039360
        %v668 = vsel %vm667, %v660, %v662
        %v669 = vsel %vm667, %v664, %v666
        %v676 = vunpack.c.l.b16 %v501
        %v677 = vunpack.c.l.b16 %v502
        %v678 = vunpack.c.l.b16 %v503
        %v679 = vunpack.c.l.b16 %v504
        %v680 = vpack.c.b16 %v677, %v676
        %v681 = vpack.c.b16 %v679, %v678
        %682 = vrot.lane.b32.xlu0 %v680, 127
        %v683 = vpop.permute.xlu0 %682
        %684 = vrot.lane.b32.xlu0 %v681, 127
        %v685 = vpop.permute.xlu0 %684
        %vm686 = vcmask 1039360
        %v689 = vsel %vm686, %v662, %v683
        %v693 = vsel %vm686, %v666, %v685
        %695 = vst [vmem:[#allocation2 + $0xa0] sm:$0xff] %v668
        %696 = vst [vmem:[#allocation2 + $0xa8] sm:$0xff] %v689
        %697 = vst [vmem:[#allocation2 + $0xb0] sm:$0xff] %v669
        %698 = vst [vmem:[#allocation2 + $0xb8] sm:$0xff] %v693
        %699 = vrot.lane.b32.xlu0 %v531, 95
        %v700 = vpop.permute.xlu0 %699
        %701 = vrot.lane.b32.xlu0 %v532, 95
        %v702 = vpop.permute.xlu0 %701
        %703 = vrot.lane.b32.xlu0 %v533, 95
        %v704 = vpop.permute.xlu0 %703
        %705 = vrot.lane.b32.xlu0 %v534, 95
        %v706 = vpop.permute.xlu0 %705
        %vm707 = vcmask 777216
        %v708 = vsel %vm707, %v700, %v702
        %v709 = vsel %vm707, %v704, %v706
        %712 = vrot.lane.b32.xlu0 %v680, 95
        %v713 = vpop.permute.xlu0 %712
        %714 = vrot.lane.b32.xlu0 %v681, 95
        %v715 = vpop.permute.xlu0 %714
        %vm716 = vcmask 777216
        %v719 = vsel %vm716, %v702, %v713
        %v723 = vsel %vm716, %v706, %v715
        %725 = vst [vmem:[#allocation2 + $0xc0] sm:$0xff] %v708
        %726 = vst [vmem:[#allocation2 + $0xc8] sm:$0xff] %v719
        %727 = vst [vmem:[#allocation2 + $0xd0] sm:$0xff] %v709
        %728 = vst [vmem:[#allocation2 + $0xd8] sm:$0xff] %v723
        %729 = vrot.lane.b32.xlu0 %v531, 94
        %v730 = vpop.permute.xlu0 %729
        %731 = vrot.lane.b32.xlu0 %v532, 94
        %v732 = vpop.permute.xlu0 %731
        %733 = vrot.lane.b32.xlu0 %v533, 94
        %v734 = vpop.permute.xlu0 %733
        %735 = vrot.lane.b32.xlu0 %v534, 94
        %v736 = vpop.permute.xlu0 %735
        %vm737 = vcmask 769024
        %v738 = vsel %vm737, %v730, %v732
        %v739 = vsel %vm737, %v734, %v736
        %742 = vrot.lane.b32.xlu0 %v680, 94
        %v743 = vpop.permute.xlu0 %742
        %744 = vrot.lane.b32.xlu0 %v681, 94
        %v745 = vpop.permute.xlu0 %744
        %vm746 = vcmask 769024
        %v749 = vsel %vm746, %v732, %v743
        %v753 = vsel %vm746, %v736, %v745
        %755 = vst [vmem:[#allocation2 + $0xe0] sm:$0xff] %v738
        %756 = vst [vmem:[#allocation2 + $0xe8] sm:$0xff] %v749
        %757 = vst [vmem:[#allocation2 + $0xf0] sm:$0xff] %v739
        %758 = vst [vmem:[#allocation2 + $0xf8] sm:$0xff] %v753
        %759 = vrot.lane.b32.xlu0 %v531, 93
        %v760 = vpop.permute.xlu0 %759
        %761 = vrot.lane.b32.xlu0 %v532, 93
        %v762 = vpop.permute.xlu0 %761
        %763 = vrot.lane.b32.xlu0 %v533, 93
        %v764 = vpop.permute.xlu0 %763
        %765 = vrot.lane.b32.xlu0 %v534, 93
        %v766 = vpop.permute.xlu0 %765
        %vm767 = vcmask 760832
        %v768 = vsel %vm767, %v760, %v762
        %v769 = vsel %vm767, %v764, %v766
        %772 = vrot.lane.b32.xlu0 %v680, 93
        %v773 = vpop.permute.xlu0 %772
        %774 = vrot.lane.b32.xlu0 %v681, 93
        %v775 = vpop.permute.xlu0 %774
        %vm776 = vcmask 760832
        %v779 = vsel %vm776, %v762, %v773
        %v783 = vsel %vm776, %v766, %v775
        %785 = vst [vmem:[#allocation2 + $0x100] sm:$0xff] %v768
        %786 = vst [vmem:[#allocation2 + $0x108] sm:$0xff] %v779
        %787 = vst [vmem:[#allocation2 + $0x110] sm:$0xff] %v769
        %788 = vst [vmem:[#allocation2 + $0x118] sm:$0xff] %v783
        %v789 = vld [vmem:[%s4] sm:$0xff]
        %v790 = vld [vmem:[%s4 + $0x8] sm:$0xf]
        %v791 = vld [vmem:[%s4 + $0xc] sm:$0xff]
        %v792 = vld [vmem:[%s4 + $0x14] sm:$0xf]
        %v793 = vld [vmem:[%s4 + $0x18] sm:$0xff]
        %v794 = vld [vmem:[%s4 + $0x20] sm:$0xf]
        %v795 = vld [vmem:[%s4 + $0x24] sm:$0xff]
        %v796 = vld [vmem:[%s4 + $0x2c] sm:$0xf]
        %v797 = vld [vmem:[#allocation2] sm:$0xff]
        %v798 = vld [vmem:[#allocation2 + $0x8] sm:$0xff]
        %v799 = vld [vmem:[#allocation2 + $0x10] sm:$0xff]
        %v800 = vld [vmem:[#allocation2 + $0x18] sm:$0xff]
        %v801 = vld [vmem:[#allocation2 + $0x20] sm:$0xff]
        %v802 = vld [vmem:[#allocation2 + $0x28] sm:$0xff]
        %v803 = vld [vmem:[#allocation2 + $0x30] sm:$0xff]
        %v804 = vld [vmem:[#allocation2 + $0x38] sm:$0xff]
        %v805 = vld [vmem:[#allocation2 + $0x40] sm:$0xff]
        %v806 = vld [vmem:[#allocation2 + $0x48] sm:$0xff]
        %v807 = vld [vmem:[#allocation2 + $0x50] sm:$0xff]
        %v808 = vld [vmem:[#allocation2 + $0x58] sm:$0xff]
        %v809 = vld [vmem:[#allocation2 + $0x60] sm:$0xff]
        %v810 = vld [vmem:[#allocation2 + $0x68] sm:$0xff]
        %v811 = vld [vmem:[#allocation2 + $0x70] sm:$0xff]
        %v812 = vld [vmem:[#allocation2 + $0x78] sm:$0xff]
        %v813 = vld [vmem:[#allocation2 + $0x80] sm:$0xff]
        %v814 = vld [vmem:[#allocation2 + $0x88] sm:$0xff]
        %v815 = vld [vmem:[#allocation2 + $0x90] sm:$0xff]
        %v816 = vld [vmem:[#allocation2 + $0x98] sm:$0xff]
        %v817 = vld [vmem:[#allocation2 + $0xa0] sm:$0xff]
        %v818 = vld [vmem:[#allocation2 + $0xa8] sm:$0xff]
        %v819 = vld [vmem:[#allocation2 + $0xb0] sm:$0xff]
        %v820 = vld [vmem:[#allocation2 + $0xb8] sm:$0xff]
        %v821 = vld [vmem:[#allocation2 + $0xc0] sm:$0xff]
        %v822 = vld [vmem:[#allocation2 + $0xc8] sm:$0xff]
        %v823 = vld [vmem:[#allocation2 + $0xd0] sm:$0xff]
        %v824 = vld [vmem:[#allocation2 + $0xd8] sm:$0xff]
        %v825 = vld [vmem:[#allocation2 + $0xe0] sm:$0xff]
        %v826 = vld [vmem:[#allocation2 + $0xe8] sm:$0xff]
        %v827 = vld [vmem:[#allocation2 + $0xf0] sm:$0xff]
        %v828 = vld [vmem:[#allocation2 + $0xf8] sm:$0xff]
        %v829 = vld [vmem:[#allocation2 + $0x100] sm:$0xff]
        %v830 = vld [vmem:[#allocation2 + $0x108] sm:$0xff]
        %v831 = vld [vmem:[#allocation2 + $0x110] sm:$0xff]
        %v832 = vld [vmem:[#allocation2 + $0x118] sm:$0xff]
        %v833 = vld [vmem:[%s5] sm:$0xff]
        %v834 = vld [vmem:[%s5 + $0x8] sm:$0xff]
        %v835 = vld [vmem:[%s5 + $0x10] sm:$0xff]
        %v836 = vld [vmem:[%s5 + $0x18] sm:$0xff]
        %838 = vset.pattern.permute.xlu0 0
        %839 = vperm.xlu0 %838, %v833
        %v840 = vpop.permute.xlu0 %839
        %843 = vset.pattern.permute.xlu0 0
        %844 = vperm.xlu0 %843, %v834
        %v845 = vpop.permute.xlu0 %844
        %848 = vset.pattern.permute.xlu0 0
        %849 = vperm.xlu0 %848, %v835
        %v850 = vpop.permute.xlu0 %849
        %853 = vset.pattern.permute.xlu0 0
        %854 = vperm.xlu0 %853, %v836
        %v855 = vpop.permute.xlu0 %854
        %v865 = vunpack.c.l.b16 %v789
        %v866 = vunpack.c.h.b16 %v789
        %v867 = vunpack.c.l.b16 %v790
        %v868 = vunpack.c.l.b16 %v791
        %v869 = vunpack.c.h.b16 %v791
        %v870 = vunpack.c.l.b16 %v792
        %v871 = vunpack.c.l.b16 %v793
        %v872 = vunpack.c.h.b16 %v793
        %v873 = vunpack.c.l.b16 %v794
        %v874 = vunpack.c.l.b16 %v795
        %v875 = vunpack.c.h.b16 %v795
        %v876 = vunpack.c.l.b16 %v796
        %v877 = vpack.c.b16 %v868, %v865
        %v878 = vpack.c.b16 %v869, %v866
        %v879 = vpack.c.b16 %v870, %v867
        %v880 = vpack.c.b16 %v874, %v871
        %v881 = vpack.c.b16 %v875, %v872
        %v882 = vpack.c.b16 %v876, %v873
        %vm887 = vcmask 261120
        %v889 = vsel %vm887, %v879, 0
        %v892 = vsel %vm887, %v882, 0
        %894 = vmatprep.subr.bf16.mxu0 %v798
        %895 = vmatpush1.bf16.msra.mxu0 %v797
        %896 = vmatprep.subr.bf16.mxu0 %v800
        %897 = vmatpush1.bf16.msra.mxu0 %v799
        %898 = vmatprep.subr.bf16.mxu0 %v802
        %899 = vmatpush1.bf16.msra.mxu0 %v801
        %900 = vmatprep.subr.bf16.mxu0 %v804
        %901 = vmatpush1.bf16.msra.mxu0 %v803
        %902 = vmatprep.subr.bf16.mxu0 %v806
        %903 = vmatpush1.bf16.msra.mxu0 %v805
        %904 = vmatprep.subr.bf16.mxu0 %v808
        %905 = vmatpush1.bf16.msra.mxu0 %v807
        %906 = vmatprep.subr.bf16.mxu0 %v810
        %907 = vmatpush1.bf16.msra.mxu0 %v809
        %908 = vmatprep.subr.bf16.mxu0 %v812
        %909 = vmatpush1.bf16.msra.mxu0 %v811
        %910 = vmatprep.subr.bf16.mxu0 %v814
        %911 = vmatpush1.bf16.msra.mxu0 %v813
        %912 = vmatprep.subr.bf16.mxu0 %v816
        %913 = vmatpush1.bf16.msra.mxu0 %v815
        %914 = vmatprep.subr.bf16.mxu0 %v818
        %915 = vmatpush1.bf16.msra.mxu0 %v817
        %916 = vmatprep.subr.bf16.mxu0 %v820
        %917 = vmatpush1.bf16.msra.mxu0 %v819
        %918 = vmatprep.subr.bf16.mxu0 %v822
        %919 = vmatpush1.bf16.msra.mxu0 %v821
        %920 = vmatprep.subr.bf16.mxu0 %v824
        %921 = vmatpush1.bf16.msra.mxu0 %v823
        %922 = vmatprep.subr.bf16.mxu0 %v826
        %923 = vmatpush1.bf16.msra.mxu0 %v825
        %924 = vmatprep.subr.bf16.mxu0 %v828
        %925 = vmatpush1.bf16.msra.mxu0 %v827
        %926 = vmatprep.mubr.bf16.mxu0 %v878
        %927 = vmatmul.mubr.bf16.gmra.mrb[0].mxu0 %v877
        %v928 = vpop.f32.mrb[0].mxu0
        %v929 = vadd.f32 %v840, %v928
        %v930 = vpop.f32.mrb[0].mxu0
        %v931 = vadd.f32 %v840, %v930
        %v932 = vpop.f32.mrb[0].mxu0
        %v933 = vadd.f32 %v845, %v932
        %v934 = vpop.f32.mrb[0].mxu0
        %v935 = vadd.f32 %v845, %v934
        %936 = vmatprep.mubr.bf16.mxu0 %v881
        %937 = vmatmul.mubr.bf16.gmra.mrb[0].mxu0 %v880
        %v938 = vpop.f32.mrb[0].mxu0
        %v939 = vadd.f32 %v850, %v938
        %v940 = vpop.f32.mrb[0].mxu0
        %v941 = vadd.f32 %v850, %v940
        %v942 = vpop.f32.mrb[0].mxu0
        %v943 = vadd.f32 %v855, %v942
        %v944 = vpop.f32.mrb[0].mxu0
        %v945 = vadd.f32 %v855, %v944
        %946 = vdwg.mxu0
        %947 = vmatprep.subr.bf16.mxu0 %v830
        %948 = vmatpush1.bf16.msra.mxu0 %v829
        %949 = vmatprep.subr.bf16.mxu0 %v832
        %950 = vmatpush1.bf16.msra.mxu0 %v831
        %951 = vmatprep.subr.bf16.mxu0 0
        %952 = vmatpush1.bf16.msra.mxu0 0
        %953 = vmatprep.subr.bf16.mxu0 0
        %954 = vmatpush1.bf16.msra.mxu0 0
        %955 = vmatprep.subr.bf16.mxu0 0
        %956 = vmatpush1.bf16.msra.mxu0 0
        %957 = vmatprep.subr.bf16.mxu0 0
        %958 = vmatpush1.bf16.msra.mxu0 0
        %959 = vmatprep.subr.bf16.mxu0 0
        %960 = vmatpush1.bf16.msra.mxu0 0
        %961 = vmatprep.subr.bf16.mxu0 0
        %962 = vmatpush1.bf16.msra.mxu0 0
        %963 = vmatprep.subr.bf16.mxu0 0
        %964 = vmatpush1.bf16.msra.mxu0 0
        %965 = vmatprep.subr.bf16.mxu0 0
        %966 = vmatpush1.bf16.msra.mxu0 0
        %967 = vmatprep.subr.bf16.mxu0 0
        %968 = vmatpush1.bf16.msra.mxu0 0
        %969 = vmatprep.subr.bf16.mxu0 0
        %970 = vmatpush1.bf16.msra.mxu0 0
        %971 = vmatprep.subr.bf16.mxu0 0
        %972 = vmatpush1.bf16.msra.mxu0 0
        %973 = vmatprep.subr.bf16.mxu0 0
        %974 = vmatpush1.bf16.msra.mxu0 0
        %975 = vmatprep.subr.bf16.mxu0 0
        %976 = vmatpush1.bf16.msra.mxu0 0
        %977 = vmatprep.subr.bf16.mxu0 0
        %978 = vmatpush1.bf16.msra.mxu0 0
        %979 = vmatprep.mubr.bf16.mxu0 0
        %980 = vmatmul.mubr.bf16.gmra.mrb[0].mxu0 %v889
        %v981 = vpop.f32.mrb[0].mxu0
        %v982 = vadd.f32 %v929, %v981
        %v983 = vpop.f32.mrb[0].mxu0
        %v984 = vadd.f32 %v931, %v983
        %v985 = vpop.f32.mrb[0].mxu0
        %v986 = vadd.f32 %v933, %v985
        %v987 = vpop.f32.mrb[0].mxu0
        %v988 = vadd.f32 %v935, %v987
        %989 = vmatprep.mubr.bf16.mxu0 0
        %990 = vmatmul.mubr.bf16.gmra.mrb[0].mxu0 %v892
        %v991 = vpop.f32.mrb[0].mxu0
        %v992 = vadd.f32 %v939, %v991
        %v993 = vpop.f32.mrb[0].mxu0
        %v994 = vadd.f32 %v941, %v993
        %v995 = vpop.f32.mrb[0].mxu0
        %v996 = vadd.f32 %v943, %v995
        %v997 = vpop.f32.mrb[0].mxu0
        %v998 = vadd.f32 %v945, %v997
        %999 = vdwg.mxu0
        %v1000 = vmax.f32 %v982, 0.0
        %v1001 = vmax.f32 %v984, 0.0
        %v1002 = vmax.f32 %v986, 0.0
        %v1003 = vmax.f32 %v988, 0.0
        %v1004 = vmax.f32 %v992, 0.0
        %v1005 = vmax.f32 %v994, 0.0
        %v1006 = vmax.f32 %v996, 0.0
        %v1007 = vmax.f32 %v998, 0.0
        %v1008 = vld [vmem:[%s480] sm:$0x3]
        %v1010 = vlaneseq
        %v1011 = vshrl.u32 %v1010, 7
        %v1012 = vsub.s32 0, %v1011
        %v1013 = vrot.slane %v1008, %v1012
        %v1014 = vlaneseq
        %v1015 = vshrl.u32 %v1014, 7
        %v1016 = vsub.s32 1, %v1015
        %v1017 = vrot.slane %v1008, %v1016
        %v1020 = vmul.f32 %v1000, %v1013
        %v1021 = vmul.f32 %v1001, %v1017
        %v1022 = vmul.f32 %v1002, %v1013
        %v1023 = vmul.f32 %v1003, %v1017
        %v1024 = vmul.f32 %v1004, %v1013
        %v1025 = vmul.f32 %v1005, %v1017
        %v1026 = vmul.f32 %v1006, %v1013
        %v1027 = vmul.f32 %v1007, %v1017
        %1028 = vst [vmem:[%s476] sm:$0xff] %v1020
        %1029 = vst [vmem:[%s476 + $0x8] sm:$0xff] %v1021
        %1030 = vst [vmem:[%s476 + $0x10] sm:$0xff] %v1022
        %1031 = vst [vmem:[%s476 + $0x18] sm:$0xff] %v1023
        %1032 = vst [vmem:[%s476 + $0x20] sm:$0xff] %v1024
        %1033 = vst [vmem:[%s476 + $0x28] sm:$0xff] %v1025
        %1034 = vst [vmem:[%s476 + $0x30] sm:$0xff] %v1026
        %1035 = vst [vmem:[%s476 + $0x38] sm:$0xff] %v1027
        %s1036 = sand.u32 %s187, 1
        %s1037 = sand.u32 %s187, 1
        %s1038 = smul.addr %s1037, 64
        %s1039 = scalar_lea.vmem [#allocation6], %s1038
        // Predicated region
        $region165: #{double_conv_forward.3} parent=151 // pred_check
          %p1040 = pneg %p197
        $region166: #{double_conv_forward.3} parent=151 // pred_check_branch
          %1042 = sbr.rel (%p1040) target = $region168
        $region167: #{double_conv_forward.3} parent=151 // pred_region
          %s1043 = smul.u32 2, %s17
          %s1044 = smul.addr %s1043, 8
          %s1045 = scalar_lea.vmem %s6, %s1044
          // Predicated region
          $region169: #{double_conv_forward.3} parent=167 // pred_check
            _
          $region170: #{double_conv_forward.3} parent=167 // pred_check_branch
            %1047 = sbr.rel (0) target = $region172
          $region171: #{double_conv_forward.3} parent=167 // pred_region
            // Predicated region
            $region173: #{double_conv_forward.3} parent=171 // pred_check
              _
            $region174: #{double_conv_forward.3} parent=171 // pred_check_branch
              %1049 = sbr.rel (0) target = $region176
            $region175: #{double_conv_forward.3} parent=171 // pred_region
              loop: start=0, step=1, limit=1
              $region177: #{double_conv_forward.3} parent=175 // loop_pre_header
                _
              $region178: #{double_conv_forward.3} parent=175 // loop_header
                %s1051 = sphi 0, %s1055
                %p1052 = scmp.ge.s32.totalorder %s1051, 1
                %s1056 = sphi %s1039, %s1039
                %s1057 = sphi %s1045, %s1045
              $region179: #{double_conv_forward.3} parent=175 // loop_header_branch
                %1054 = sbr.rel (%p1052) target = $region183
              $region180: #{double_conv_forward.3} parent=175 // loop_body
                %v1058 = vld [vmem:[%s1056] sm:$0xff]
                %1059 = vst [vmem:[%s1057] sm:$0xff] %v1058
                %v1060 = vld [vmem:[%s1056 + $0x8] sm:$0xff]
                %1061 = vst [vmem:[%s1057 + $0x8] sm:$0xff] %v1060
                %v1062 = vld [vmem:[%s1056 + $0x10] sm:$0xff]
                %1063 = vst [vmem:[%s1057 + $0xa0] sm:$0xff] %v1062
                %v1064 = vld [vmem:[%s1056 + $0x18] sm:$0xff]
                %1065 = vst [vmem:[%s1057 + $0xa8] sm:$0xff] %v1064
                %v1066 = vld [vmem:[%s1056 + $0x20] sm:$0xff]
                %1067 = vst [vmem:[%s1057 + $0x140] sm:$0xff] %v1066
                %v1068 = vld [vmem:[%s1056 + $0x28] sm:$0xff]
                %1069 = vst [vmem:[%s1057 + $0x148] sm:$0xff] %v1068
                %v1070 = vld [vmem:[%s1056 + $0x30] sm:$0xff]
                %1071 = vst [vmem:[%s1057 + $0x1e0] sm:$0xff] %v1070
                %v1072 = vld [vmem:[%s1056 + $0x38] sm:$0xff]
                %1073 = vst [vmem:[%s1057 + $0x1e8] sm:$0xff] %v1072
              $region181: #{double_conv_forward.3} parent=175 // loop_footer
                %s1055 = sadd.s32 1, %s1051
              $region182: #{double_conv_forward.3} parent=175 // loop_footer_branch
                %1050 = sbr.rel target = $region178
              $region183: #{double_conv_forward.3} parent=175 // loop_exit
                _
            $region176: #{double_conv_forward.3} parent=171 // pred_fallthru
              _
            // Predicated region
            $region184: #{double_conv_forward.3} parent=171 // pred_check
              _
            $region185: #{double_conv_forward.3} parent=171 // pred_check_branch
              %1075 = sbr.rel target = $region187
            $region186: #{double_conv_forward.3} parent=171 // pred_region
              _
            $region187: #{double_conv_forward.3} parent=171 // pred_fallthru
              _
          $region172: #{double_conv_forward.3} parent=167 // pred_fallthru
            _
          %1076 = vnop
        $region168: #{double_conv_forward.3} parent=151 // pred_fallthru
          _
      $region152: #{double_conv_forward.3} parent=5 // pred_fallthru
        _
      %p1077 = scmp.le.s32.totalorder 2, %s12
      // Predicated region
      $region188: #{double_conv_forward.3} parent=5 // pred_check
        %p1078 = pneg %p1077
      $region189: #{double_conv_forward.3} parent=5 // pred_check_branch
        %1080 = sbr.rel (%p1078) target = $region191
      $region190: #{double_conv_forward.3} parent=5 // pred_region
        %s1081 = ssub.s32 %s12, 2
        // Predicated region
        $region192: #{double_conv_forward.3} parent=190 // pred_check
          %p1082 = pneg %p203
        $region193: #{double_conv_forward.3} parent=190 // pred_check_branch
          %1084 = sbr.rel (%p1082) target = $region195
        $region194: #{double_conv_forward.3} parent=190 // pred_region
          %s1085 = sand.u32 %s188, 1
          %s1086 = sand.u32 %s188, 1
          %s1087 = smul.addr %s1086, 64
          %s1088 = scalar_lea.vmem [#allocation6], %s1087
        $region195: #{double_conv_forward.3} parent=190 // pred_fallthru
          _
      $region191: #{double_conv_forward.3} parent=5 // pred_fallthru
        _
    $region6: #{double_conv_forward.3} parent=1 // loop_footer
      %s16 = sadd.s32 1, %s12
    $region7: #{double_conv_forward.3} parent=1 // loop_footer_branch
      %11 = sbr.rel target = $region3
    $region8: #{double_conv_forward.3} parent=1 // loop_exit
      _

</llo_original>
